<compile_context>
chip_gen: v7x
topology: tpu7x:2x2x1
jax: 0.10.0
libtpu: 0.0.40
codegen_flags: <defaults>
</compile_context>

<pallas_src>
import jax
import jax.numpy as jnp
from jax.experimental import pallas as pl
from jax.experimental.pallas import tpu as pltpu

BN_EPS = 1e-5


# ----------------------------------------------------------------------------
# Single fused kernel: embedding + (conv->bn->relu->pool)* + final dense
# ----------------------------------------------------------------------------
def _make_fused_kernel(conv_cfg, mm_dtype):
    n_layers = len(conv_cfg)

    def kernel(*refs):
        x_ref = refs[0]                        # (D, TB, S)      f32
        kw_ref = refs[1]                       # (E*TB, D*TB)    mm_dtype (kron(2 We^T, I_TB))
        be_ref = refs[2]                       # (E*TB, 1)       f32 (scaling-folded bias)
        conv_refs = refs[3:3 + 4 * n_layers]   # per layer: W2, bias, bn_scale, bn_shift
        wd_ref = refs[3 + 4 * n_layers]        # (Cf, Lf*labels) mm_dtype
        bd_ref = refs[4 + 4 * n_layers]        # (1, labels)     f32
        out_ref = refs[5 + 4 * n_layers]       # (TB, labels)    f32

        D, TB, S = x_ref.shape
        E = kw_ref.shape[0] // TB

        # ---- amino-acid embedding (input scaling folded into the weights) --
        # All reshapes below only merge/split leading dims with TB == 8, so
        # they are layout-free on the (8, 128) vreg tiling.
        x2d = x_ref[...].reshape(D * TB, S).astype(mm_dtype)
        h2d = jnp.dot(kw_ref[...], x2d,
                      preferred_element_type=jnp.float32)       # (E*TB, S)
        h2d = h2d + be_ref[...]
        h = h2d.reshape(E, TB, S)                               # (L0=E, TB, C0=S)

        # ---- conv -> batch-norm(eval) -> relu -> (dropout=0) -> max-pool ---
        for li in range(n_layers):
            w_ref, b_ref, sc_ref, sh_ref = conv_refs[4 * li:4 * li + 4]
            K, ps, st = conv_cfg[li]
            L, _, cin = h.shape
            kcout = w_ref.shape[1]
            cout = kcout // K
            pad = K // 2
            Lp = L + 2 * pad

            if pad > 0:                                          # 'same' zero pad
                zpad = jnp.zeros((pad, TB, cin), jnp.float32)
                hp = jnp.concatenate([zpad, h, zpad], axis=0)
            else:
                hp = h
            hp2d = hp.reshape(Lp * TB, cin).astype(mm_dtype)
            # single MXU push per layer: weight stacked on the output dim
            z = jnp.dot(hp2d, w_ref[...],
                        preferred_element_type=jnp.float32)      # (Lp*TB, K*Cout)
            z = z.reshape(Lp, TB, kcout)
            # sum K row-shifted column groups -> conv output
            y = z[0:L, :, 0:cout]
            for k in range(1, K):
                y = y + z[k:k + L, :, k * cout:(k + 1) * cout]
            y = y + b_ref[...]                                   # conv bias
            y = y * sc_ref[...] + sh_ref[...]                    # folded BatchNorm1d
            y = jnp.maximum(y, 0.0)                              # ReLU
            # dropout = 0.0 -> identity

            if ps is not None:                                   # MaxPool1d
                p = ps // 2
                Lo = (L + 2 * p - ps) // st + 1
                if p > 0:
                    neg = jnp.full((p, TB, cout), -3.0e38, jnp.float32)
                    ypad = jnp.concatenate([neg, y, neg], axis=0)
                else:
                    ypad = y
                yw = ypad[:st * Lo].reshape(Lo, st, TB, cout)
                pooled = yw[:, 0]
                for kk in range(1, ps):
                    pooled = jnp.maximum(pooled, yw[:, kk])
                y = pooled
            h = y

        # ---- flatten + final dense (out_activation = "linear") -------------
        Lf, _, Cf = h.shape
        labels = out_ref.shape[1]
        h2 = h.reshape(Lf * TB, Cf).astype(mm_dtype)
        z2 = jnp.dot(h2, wd_ref[...],
                     preferred_element_type=jnp.float32)         # (Lf*TB, Lf*labels)
        out = bd_ref[...]
        for l in range(Lf):
            out = out + z2[l * TB:(l + 1) * TB, l * labels:(l + 1) * labels]
        out_ref[...] = out

    return kernel


# ----------------------------------------------------------------------------
# Wrapper: weight-layout plumbing (outside the kernel) + one gridded pallas_call
# ----------------------------------------------------------------------------
def model_conv_forward(params, x, covar=None, *, batch_tile=8,
                       matmul_dtype=jnp.bfloat16):
    # x: (B, 1, S, D), matching the PyTorch module input before squeeze.
    assert covar is None  # TODO(synk): covariate concatenation path not implemented
    x = jnp.squeeze(x, axis=1).astype(jnp.float32)               # (B, S, D)
    B, S, D = x.shape
    tb = batch_tile
    assert tb % 8 == 0 and B % tb == 0, "batch must tile into multiples of 8"
    x_t = jnp.transpose(x, (2, 0, 1))                            # (D, B, S)

    # -- embedding: fold 2*(x-0.5) into the weights, build per-tile kron -----
    w_e = params["w_embed"].astype(jnp.float32)                  # (D, E)
    b_e = params["b_embed"].astype(jnp.float32)                  # (E,)
    E = w_e.shape[1]
    we_fold = (2.0 * w_e).T                                      # (E, D)
    be_fold = b_e - jnp.sum(w_e, axis=0)                         # (E,)
    kron_w = jnp.kron(we_fold, jnp.eye(tb, dtype=jnp.float32)).astype(matmul_dtype)
    be_rows = jnp.repeat(be_fold, tb).reshape(E * tb, 1)         # (E*tb, 1)

    # -- conv layers: (Cin, K*Cout) weight + folded eval-mode batch norm -----
    conv_inputs, conv_cfg = [], []
    flops_per_tile = 2 * (E * tb) * (D * tb) * S
    c_in, length = S, E                                          # torch Conv1d: C=S, L=E
    for layer in params["conv_layers"]:
        w = layer["w"].astype(jnp.float32)                       # (Cout, Cin, K)
        cout, cin, K = w.shape
        assert cin == c_in
        scale = layer["gamma"] / jnp.sqrt(layer["var"] + BN_EPS)
        shift = layer["beta"] - layer["mean"] * scale
        w2 = jnp.transpose(w, (1, 2, 0)).reshape(cin, K * cout).astype(matmul_dtype)
        conv_inputs += [
            w2,
            layer["b"].reshape(1, cout).astype(jnp.float32),
            scale.reshape(1, cout).astype(jnp.float32),
            shift.reshape(1, cout).astype(jnp.float32),
        ]
        Lp = length + 2 * (K // 2)
        flops_per_tile += 2 * (Lp * tb) * cin * (K * cout)
        ps, st = layer["pool_size"], layer["pool_stride"]
        if ps is not None:
            st = ps if st is None else st
            assert st == ps, "kernel implements the default stride == pool_size"
            length = (length + 2 * (ps // 2) - ps) // st + 1
            conv_cfg.append((K, ps, st))
        else:
            conv_cfg.append((K, None, None))
        c_in = cout

    # -- final dense: reorder rows once to the kernel's (l, c) order ---------
    labels_dim = params["b_dense"].shape[0]
    Lf, Cf = length, c_in
    wd2 = params["w_dense"].reshape(Cf, Lf, labels_dim) \
                           .reshape(Cf, Lf * labels_dim).astype(matmul_dtype)
    bd = params["b_dense"].reshape(1, labels_dim).astype(jnp.float32)
    flops_per_tile += 2 * (Lf * tb) * Cf * (Lf * labels_dim)

    inputs = [x_t, kron_w, be_rows] + conv_inputs + [wd2, bd]

    def _const_map(ndim):
        return lambda i: (0,) * ndim

    in_specs = [pl.BlockSpec((D, tb, S), lambda i: (0, i, 0))]
    for a in inputs[1:]:
        in_specs.append(pl.BlockSpec(a.shape, _const_map(a.ndim)))
    out_specs = pl.BlockSpec((tb, labels_dim), lambda i: (i, 0))

    n_tiles = B // tb
    bytes_accessed = int(x_t.size * x_t.dtype.itemsize
                         + sum(int(a.size) * a.dtype.itemsize for a in inputs[1:])
                         + B * labels_dim * 4)
    cost = pl.CostEstimate(flops=int(flops_per_tile) * n_tiles,
                           transcendentals=0,
                           bytes_accessed=bytes_accessed)

    return pl.pallas_call(
        _make_fused_kernel(tuple(conv_cfg), matmul_dtype),
        out_shape=jax.ShapeDtypeStruct((B, labels_dim), jnp.float32),
        grid=(n_tiles,),
        in_specs=in_specs,
        out_specs=out_specs,
        compiler_params=pltpu.CompilerParams(dimension_semantics=("parallel",)),
        cost_estimate=cost,
    )(*inputs)


# ----------------------------------------------------------------------------
# Parameters (deterministic synthetic init, PyTorch-style layouts)
# ----------------------------------------------------------------------------
def init_params(key, S, D, labels_dim, filters=(16, 8), filter_widths=(3, 3),
                pool_sizes=(2, 2), aa_embedding_dim=0):
    E = D if aa_embedding_dim == 0 else aa_embedding_dim
    keys = iter(jax.random.split(key, 64))
    scale = 0.1

    def nrm(shape):
        return scale * jax.random.normal(next(keys), shape, dtype=jnp.float32)

    params = {"w_embed": nrm((D, E)), "b_embed": nrm((E,))}
    conv_layers = []
    c_in, length = S, E
    for f, fw, ps in zip(filters, filter_widths, pool_sizes):
        conv_layers.append({
            "w": nrm((f, c_in, fw)),                 # Conv1d weight (Cout, Cin, K)
            "b": nrm((f,)),
            "gamma": 1.0 + nrm((f,)),                # BatchNorm1d (eval mode)
            "beta": nrm((f,)),
            "mean": nrm((f,)),
            "var": 1.0 + 0.5 * jnp.abs(nrm((f,))),
            "pool_size": ps,
            "pool_stride": None,                     # default: stride = pool_size
        })
        c_in = f
        if ps is not None:
            length = (length + 2 * (ps // 2) - ps) // ps + 1
    params["conv_layers"] = conv_layers
    params["w_dense"] = nrm((c_in * length, labels_dim))   # matches module formula
    params["b_dense"] = nrm((labels_dim,))
    return params


# ----------------------------------------------------------------------------
# Pure-JAX reference mirroring the PyTorch math (torch layouts) for checking
# ----------------------------------------------------------------------------
def reference_forward(params, x):
    hp_prec = "highest"
    x = jnp.squeeze(x, axis=1).astype(jnp.float32)               # (B, S, D)
    x = 2.0 * (x - 0.5)
    h = jnp.einsum("bsd,de->bse", x, params["w_embed"],
                   precision=hp_prec) + params["b_embed"]        # (B, S, E)
    # torch Conv1d reads this as (B, C=S, L=E)
    for layer in params["conv_layers"]:
        w, b = layer["w"], layer["b"]                            # (Cout, Cin, K)
        K = w.shape[2]
        pad = K // 2
        L = h.shape[2]
        hp = jnp.pad(h, ((0, 0), (0, 0), (pad, pad)))
        y = b[None, :, None]
        for k in range(K):
            y = y + jnp.einsum("oc,bcl->bol", w[:, :, k], hp[:, :, k:k + L],
                               precision=hp_prec)
        inv = layer["gamma"] / jnp.sqrt(layer["var"] + BN_EPS)
        y = (y - layer["mean"][None, :, None]) * inv[None, :, None] \
            + layer["beta"][None, :, None]
        y = jnp.maximum(y, 0.0)
        ps = layer["pool_size"]
        if ps is not None:
            st = layer["pool_stride"] or ps
            p = ps // 2
            Lc = y.shape[2]
            Lo = (Lc + 2 * p - ps) // st + 1
            yp = jnp.pad(y, ((0, 0), (0, 0), (p, p)), constant_values=-3.0e38)
            y = yp[:, :, :st * Lo].reshape(y.shape[0], y.shape[1], Lo, st).max(-1)
        h = y
    feat = h.reshape(h.shape[0], -1)                             # (B, C*L) torch flatten
    return jnp.dot(feat, params["w_dense"], precision=hp_prec) + params["b_dense"]


if __name__ == "__main__":
    B, S, D = 16, 16, 20          # batch, sequence positions, amino-acid features
    labels_dim = 8

    key = jax.random.PRNGKey(0)
    kp, kx = jax.random.split(key)
    params = init_params(kp, S, D, labels_dim)

    # one-hot-like values in [0, 1]; shape (B, 1, S, D) like the PyTorch input
    x = jax.random.uniform(kx, (B, 1, S, D), dtype=jnp.float32)

    ref = reference_forward(params, x)

    # f32 matmul-operand mode: tight structural check
    out_f32 = jax.block_until_ready(
        model_conv_forward(params, x, matmul_dtype=jnp.float32))
    assert out_f32.shape == (B, labels_dim)
    err_f32 = float(jnp.max(jnp.abs(out_f32 - ref)))
    assert err_f32 < 1e-2, f"f32 Pallas vs reference mismatch: {err_f32}"

    # bf16 matmul-operand fast path (f32 accumulation / f32 elementwise)
    out_bf16 = jax.block_until_ready(
        model_conv_forward(params, x, matmul_dtype=jnp.bfloat16))
    err_bf16 = float(jnp.max(jnp.abs(out_bf16 - ref)))
    assert err_bf16 < 3e-2, f"bf16 Pallas vs reference mismatch: {err_bf16}"

    print("KERNEL_OK")
</pallas_src>

<mosaic_0001>
module attributes {stable_mosaic.version = 11 : i64} {
  func.func @kernel(%arg0: i32, %arg1: memref<20x8x16xf32, #tpu.memory_space<vmem>>, %arg2: memref<160x160xf32, #tpu.memory_space<vmem>>, %arg3: memref<160x1xf32, #tpu.memory_space<vmem>>, %arg4: memref<16x48xf32, #tpu.memory_space<vmem>>, %arg5: memref<1x16xf32, #tpu.memory_space<vmem>>, %arg6: memref<1x16xf32, #tpu.memory_space<vmem>>, %arg7: memref<1x16xf32, #tpu.memory_space<vmem>>, %arg8: memref<16x24xf32, #tpu.memory_space<vmem>>, %arg9: memref<1x8xf32, #tpu.memory_space<vmem>>, %arg10: memref<1x8xf32, #tpu.memory_space<vmem>>, %arg11: memref<1x8xf32, #tpu.memory_space<vmem>>, %arg12: memref<8x48xf32, #tpu.memory_space<vmem>>, %arg13: memref<1x8xf32, #tpu.memory_space<vmem>>, %arg14: memref<8x8xf32, #tpu.memory_space<vmem>>) attributes {dimension_semantics = [#tpu.dimension_semantics<parallel>], iteration_bounds = array<i64: 2>, scalar_prefetch = 0 : i64, scratch_operands = 0 : i64, tpu.core_type = #tpu.core_type<tc>, window_params = [{transform_indices = @transform_0, window_bounds = array<i64: 20, 8, 16>}, {pipeline_mode = #tpu.pipeline_mode<synchronous>, transform_indices = @transform_1, window_bounds = array<i64: 160, 160>}, {pipeline_mode = #tpu.pipeline_mode<synchronous>, transform_indices = @transform_2, window_bounds = array<i64: 160, 1>}, {pipeline_mode = #tpu.pipeline_mode<synchronous>, transform_indices = @transform_3, window_bounds = array<i64: 16, 48>}, {pipeline_mode = #tpu.pipeline_mode<synchronous>, transform_indices = @transform_4, window_bounds = array<i64: 1, 16>}, {pipeline_mode = #tpu.pipeline_mode<synchronous>, transform_indices = @transform_5, window_bounds = array<i64: 1, 16>}, {pipeline_mode = #tpu.pipeline_mode<synchronous>, transform_indices = @transform_6, window_bounds = array<i64: 1, 16>}, {pipeline_mode = #tpu.pipeline_mode<synchronous>, transform_indices = @transform_7, window_bounds = array<i64: 16, 24>}, {pipeline_mode = #tpu.pipeline_mode<synchronous>, transform_indices = @transform_8, window_bounds = array<i64: 1, 8>}, {pipeline_mode = #tpu.pipeline_mode<synchronous>, transform_indices = @transform_9, window_bounds = array<i64: 1, 8>}, {pipeline_mode = #tpu.pipeline_mode<synchronous>, transform_indices = @transform_10, window_bounds = array<i64: 1, 8>}, {pipeline_mode = #tpu.pipeline_mode<synchronous>, transform_indices = @transform_11, window_bounds = array<i64: 8, 48>}, {pipeline_mode = #tpu.pipeline_mode<synchronous>, transform_indices = @transform_12, window_bounds = array<i64: 1, 8>}, {transform_indices = @transform_13, window_bounds = array<i64: 8, 8>}]} {
    %c0 = arith.constant 0 : index
    %c0_0 = arith.constant 0 : index
    %c0_1 = arith.constant 0 : index
    %0 = vector.load %arg1[%c0, %c0_0, %c0_1] : memref<20x8x16xf32, #tpu.memory_space<vmem>>, vector<20x8x16xf32>
    %1 = vector.shape_cast %0 : vector<20x8x16xf32> to vector<160x16xf32>
    %c0_2 = arith.constant 0 : index
    %c0_3 = arith.constant 0 : index
    %2 = vector.load %arg2[%c0_2, %c0_3] : memref<160x160xf32, #tpu.memory_space<vmem>>, vector<160x160xf32>
    %cst = arith.constant dense<0.000000e+00> : vector<160x16xf32>
    %3 = tpu.matmul %2, %1, %cst {dimension_numbers = #tpu.dot_dimension_numbers<[1], [0], [0], [1], [0, 0, 1, 1], [], []>} : vector<160x160xf32>, vector<160x16xf32>, vector<160x16xf32> -> vector<160x16xf32>
    %c0_4 = arith.constant 0 : index
    %c0_5 = arith.constant 0 : index
    %4 = vector.load %arg3[%c0_4, %c0_5] : memref<160x1xf32, #tpu.memory_space<vmem>>, vector<160x1xf32>
    %5 = vector.broadcast %4 : vector<160x1xf32> to vector<160x16xf32>
    %6 = arith.addf %3, %5 : vector<160x16xf32>
    %7 = vector.shape_cast %6 : vector<160x16xf32> to vector<20x8x16xf32>
    %cst_6 = arith.constant 0.000000e+00 : f32
    %8 = vector.broadcast %cst_6 : f32 to vector<1x8x16xf32>
    %9 = tpu.concatenate %8, %7, %8 in 0 : vector<1x8x16xf32>, vector<20x8x16xf32>, vector<1x8x16xf32> -> vector<22x8x16xf32>
    %10 = vector.shape_cast %9 : vector<22x8x16xf32> to vector<176x16xf32>
    %c0_7 = arith.constant 0 : index
    %c0_8 = arith.constant 0 : index
    %11 = vector.load %arg4[%c0_7, %c0_8] : memref<16x48xf32, #tpu.memory_space<vmem>>, vector<16x48xf32>
    %cst_9 = arith.constant dense<0.000000e+00> : vector<176x48xf32>
    %12 = tpu.matmul %10, %11, %cst_9 {dimension_numbers = #tpu.dot_dimension_numbers<[1], [0], [0], [1], [0, 0, 1, 1], [], []>} : vector<176x16xf32>, vector<16x48xf32>, vector<176x48xf32> -> vector<176x48xf32>
    %13 = vector.shape_cast %12 : vector<176x48xf32> to vector<22x8x48xf32>
    %14 = vector.extract_strided_slice %13 {offsets = [0, 0, 0], sizes = [20, 8, 16], strides = [1, 1, 1]} : vector<22x8x48xf32> to vector<20x8x16xf32>
    %15 = vector.extract_strided_slice %13 {offsets = [1, 0, 16], sizes = [20, 8, 16], strides = [1, 1, 1]} : vector<22x8x48xf32> to vector<20x8x16xf32>
    %16 = arith.addf %14, %15 : vector<20x8x16xf32>
    %17 = vector.extract_strided_slice %13 {offsets = [2, 0, 32], sizes = [20, 8, 16], strides = [1, 1, 1]} : vector<22x8x48xf32> to vector<20x8x16xf32>
    %18 = arith.addf %16, %17 : vector<20x8x16xf32>
    %c0_10 = arith.constant 0 : index
    %c0_11 = arith.constant 0 : index
    %19 = vector.load %arg5[%c0_10, %c0_11] : memref<1x16xf32, #tpu.memory_space<vmem>>, vector<1x16xf32>
    %20 = vector.shape_cast %19 : vector<1x16xf32> to vector<1x1x16xf32>
    %21 = vector.broadcast %20 : vector<1x1x16xf32> to vector<20x8x16xf32>
    %22 = arith.addf %18, %21 : vector<20x8x16xf32>
    %c0_12 = arith.constant 0 : index
    %c0_13 = arith.constant 0 : index
    %23 = vector.load %arg6[%c0_12, %c0_13] : memref<1x16xf32, #tpu.memory_space<vmem>>, vector<1x16xf32>
    %24 = vector.shape_cast %23 : vector<1x16xf32> to vector<1x1x16xf32>
    %25 = vector.broadcast %24 : vector<1x1x16xf32> to vector<20x8x16xf32>
    %26 = arith.mulf %22, %25 : vector<20x8x16xf32>
    %c0_14 = arith.constant 0 : index
    %c0_15 = arith.constant 0 : index
    %27 = vector.load %arg7[%c0_14, %c0_15] : memref<1x16xf32, #tpu.memory_space<vmem>>, vector<1x16xf32>
    %28 = vector.shape_cast %27 : vector<1x16xf32> to vector<1x1x16xf32>
    %29 = vector.broadcast %28 : vector<1x1x16xf32> to vector<20x8x16xf32>
    %30 = arith.addf %26, %29 : vector<20x8x16xf32>
    %cst_16 = arith.constant 0.000000e+00 : f32
    %31 = vector.broadcast %cst_16 : f32 to vector<20x8x16xf32>
    %32 = arith.maximumf %30, %31 : vector<20x8x16xf32>
    %cst_17 = arith.constant -3.000000e+38 : f32
    %33 = vector.broadcast %cst_17 : f32 to vector<1x8x16xf32>
    %34 = tpu.concatenate %33, %32, %33 in 0 : vector<1x8x16xf32>, vector<20x8x16xf32>, vector<1x8x16xf32> -> vector<22x8x16xf32>
    %35 = vector.shape_cast %34 : vector<22x8x16xf32> to vector<11x2x8x16xf32>
    %36 = vector.extract_strided_slice %35 {offsets = [0, 0, 0, 0], sizes = [11, 1, 8, 16], strides = [1, 1, 1, 1]} : vector<11x2x8x16xf32> to vector<11x1x8x16xf32>
    %37 = vector.shape_cast %36 : vector<11x1x8x16xf32> to vector<11x8x16xf32>
    %38 = vector.extract_strided_slice %35 {offsets = [0, 1, 0, 0], sizes = [11, 1, 8, 16], strides = [1, 1, 1, 1]} : vector<11x2x8x16xf32> to vector<11x1x8x16xf32>
    %39 = vector.shape_cast %38 : vector<11x1x8x16xf32> to vector<11x8x16xf32>
    %40 = arith.maximumf %37, %39 : vector<11x8x16xf32>
    %cst_18 = arith.constant 0.000000e+00 : f32
    %41 = vector.broadcast %cst_18 : f32 to vector<1x8x16xf32>
    %42 = tpu.concatenate %41, %40, %41 in 0 : vector<1x8x16xf32>, vector<11x8x16xf32>, vector<1x8x16xf32> -> vector<13x8x16xf32>
    %43 = vector.shape_cast %42 : vector<13x8x16xf32> to vector<104x16xf32>
    %c0_19 = arith.constant 0 : index
    %c0_20 = arith.constant 0 : index
    %44 = vector.load %arg8[%c0_19, %c0_20] : memref<16x24xf32, #tpu.memory_space<vmem>>, vector<16x24xf32>
    %cst_21 = arith.constant dense<0.000000e+00> : vector<104x24xf32>
    %45 = tpu.matmul %43, %44, %cst_21 {dimension_numbers = #tpu.dot_dimension_numbers<[1], [0], [0], [1], [0, 0, 1, 1], [], []>} : vector<104x16xf32>, vector<16x24xf32>, vector<104x24xf32> -> vector<104x24xf32>
    %46 = vector.shape_cast %45 : vector<104x24xf32> to vector<13x8x24xf32>
    %47 = vector.extract_strided_slice %46 {offsets = [0, 0, 0], sizes = [11, 8, 8], strides = [1, 1, 1]} : vector<13x8x24xf32> to vector<11x8x8xf32>
    %48 = vector.extract_strided_slice %46 {offsets = [1, 0, 8], sizes = [11, 8, 8], strides = [1, 1, 1]} : vector<13x8x24xf32> to vector<11x8x8xf32>
    %49 = arith.addf %47, %48 : vector<11x8x8xf32>
    %50 = vector.extract_strided_slice %46 {offsets = [2, 0, 16], sizes = [11, 8, 8], strides = [1, 1, 1]} : vector<13x8x24xf32> to vector<11x8x8xf32>
    %51 = arith.addf %49, %50 : vector<11x8x8xf32>
    %c0_22 = arith.constant 0 : index
    %c0_23 = arith.constant 0 : index
    %52 = vector.load %arg9[%c0_22, %c0_23] : memref<1x8xf32, #tpu.memory_space<vmem>>, vector<1x8xf32>
    %53 = vector.shape_cast %52 : vector<1x8xf32> to vector<1x1x8xf32>
    %54 = vector.broadcast %53 : vector<1x1x8xf32> to vector<11x8x8xf32>
    %55 = arith.addf %51, %54 : vector<11x8x8xf32>
    %c0_24 = arith.constant 0 : index
    %c0_25 = arith.constant 0 : index
    %56 = vector.load %arg10[%c0_24, %c0_25] : memref<1x8xf32, #tpu.memory_space<vmem>>, vector<1x8xf32>
    %57 = vector.shape_cast %56 : vector<1x8xf32> to vector<1x1x8xf32>
    %58 = vector.broadcast %57 : vector<1x1x8xf32> to vector<11x8x8xf32>
    %59 = arith.mulf %55, %58 : vector<11x8x8xf32>
    %c0_26 = arith.constant 0 : index
    %c0_27 = arith.constant 0 : index
    %60 = vector.load %arg11[%c0_26, %c0_27] : memref<1x8xf32, #tpu.memory_space<vmem>>, vector<1x8xf32>
    %61 = vector.shape_cast %60 : vector<1x8xf32> to vector<1x1x8xf32>
    %62 = vector.broadcast %61 : vector<1x1x8xf32> to vector<11x8x8xf32>
    %63 = arith.addf %59, %62 : vector<11x8x8xf32>
    %cst_28 = arith.constant 0.000000e+00 : f32
    %64 = vector.broadcast %cst_28 : f32 to vector<11x8x8xf32>
    %65 = arith.maximumf %63, %64 : vector<11x8x8xf32>
    %cst_29 = arith.constant -3.000000e+38 : f32
    %66 = vector.broadcast %cst_29 : f32 to vector<1x8x8xf32>
    %67 = tpu.concatenate %66, %65, %66 in 0 : vector<1x8x8xf32>, vector<11x8x8xf32>, vector<1x8x8xf32> -> vector<13x8x8xf32>
    %68 = vector.extract_strided_slice %67 {offsets = [0, 0, 0], sizes = [12, 8, 8], strides = [1, 1, 1]} : vector<13x8x8xf32> to vector<12x8x8xf32>
    %69 = vector.shape_cast %68 : vector<12x8x8xf32> to vector<6x2x8x8xf32>
    %70 = vector.extract_strided_slice %69 {offsets = [0, 0, 0, 0], sizes = [6, 1, 8, 8], strides = [1, 1, 1, 1]} : vector<6x2x8x8xf32> to vector<6x1x8x8xf32>
    %71 = vector.shape_cast %70 : vector<6x1x8x8xf32> to vector<6x8x8xf32>
    %72 = vector.extract_strided_slice %69 {offsets = [0, 1, 0, 0], sizes = [6, 1, 8, 8], strides = [1, 1, 1, 1]} : vector<6x2x8x8xf32> to vector<6x1x8x8xf32>
    %73 = vector.shape_cast %72 : vector<6x1x8x8xf32> to vector<6x8x8xf32>
    %74 = arith.maximumf %71, %73 : vector<6x8x8xf32>
    %75 = vector.shape_cast %74 : vector<6x8x8xf32> to vector<48x8xf32>
    %c0_30 = arith.constant 0 : index
    %c0_31 = arith.constant 0 : index
    %76 = vector.load %arg12[%c0_30, %c0_31] : memref<8x48xf32, #tpu.memory_space<vmem>>, vector<8x48xf32>
    %cst_32 = arith.constant dense<0.000000e+00> : vector<48x48xf32>
    %77 = tpu.matmul %75, %76, %cst_32 {dimension_numbers = #tpu.dot_dimension_numbers<[1], [0], [0], [1], [0, 0, 1, 1], [], []>} : vector<48x8xf32>, vector<8x48xf32>, vector<48x48xf32> -> vector<48x48xf32>
    %c0_33 = arith.constant 0 : index
    %c0_34 = arith.constant 0 : index
    %78 = vector.load %arg13[%c0_33, %c0_34] : memref<1x8xf32, #tpu.memory_space<vmem>>, vector<1x8xf32>
    %79 = vector.extract_strided_slice %77 {offsets = [0, 0], sizes = [8, 8], strides = [1, 1]} : vector<48x48xf32> to vector<8x8xf32>
    %80 = vector.broadcast %78 : vector<1x8xf32> to vector<8x8xf32>
    %81 = arith.addf %80, %79 : vector<8x8xf32>
    %82 = vector.extract_strided_slice %77 {offsets = [8, 8], sizes = [8, 8], strides = [1, 1]} : vector<48x48xf32> to vector<8x8xf32>
    %83 = arith.addf %81, %82 : vector<8x8xf32>
    %84 = vector.extract_strided_slice %77 {offsets = [16, 16], sizes = [8, 8], strides = [1, 1]} : vector<48x48xf32> to vector<8x8xf32>
    %85 = arith.addf %83, %84 : vector<8x8xf32>
    %86 = vector.extract_strided_slice %77 {offsets = [24, 24], sizes = [8, 8], strides = [1, 1]} : vector<48x48xf32> to vector<8x8xf32>
    %87 = arith.addf %85, %86 : vector<8x8xf32>
    %88 = vector.extract_strided_slice %77 {offsets = [32, 32], sizes = [8, 8], strides = [1, 1]} : vector<48x48xf32> to vector<8x8xf32>
    %89 = arith.addf %87, %88 : vector<8x8xf32>
    %90 = vector.extract_strided_slice %77 {offsets = [40, 40], sizes = [8, 8], strides = [1, 1]} : vector<48x48xf32> to vector<8x8xf32>
    %91 = arith.addf %89, %90 : vector<8x8xf32>
    %c0_35 = arith.constant 0 : index
    %c0_36 = arith.constant 0 : index
    %92 = vector.load %arg14[%c0_35, %c0_36] : memref<8x8xf32, #tpu.memory_space<vmem>>, vector<8x8xf32>
    tpu.vector_store %arg14[%c0_35, %c0_36], %91 {strides = array<i32>} : memref<8x8xf32, #tpu.memory_space<vmem>>, vector<8x8xf32>,
    return
  }
  func.func @transform_0(%arg0: i32) -> (i32, i32, i32) {
    %c0_i32 = arith.constant 0 : i32
    %c0_i32_0 = arith.constant 0 : i32
    %c0_i32_1 = arith.constant 0 : i32
    return %c0_i32, %arg0, %c0_i32_0 : i32, i32, i32
  }
  func.func @transform_1(%arg0: i32) -> (i32, i32) {
    %c0_i32 = arith.constant 0 : i32
    %c0_i32_0 = arith.constant 0 : i32
    %c0_i32_1 = arith.constant 0 : i32
    return %c0_i32, %c0_i32_0 : i32, i32
  }
  func.func @transform_2(%arg0: i32) -> (i32, i32) {
    %c0_i32 = arith.constant 0 : i32
    %c0_i32_0 = arith.constant 0 : i32
    %c0_i32_1 = arith.constant 0 : i32
    return %c0_i32, %c0_i32_0 : i32, i32
  }
  func.func @transform_3(%arg0: i32) -> (i32, i32) {
    %c0_i32 = arith.constant 0 : i32
    %c0_i32_0 = arith.constant 0 : i32
    %c0_i32_1 = arith.constant 0 : i32
    return %c0_i32, %c0_i32_0 : i32, i32
  }
  func.func @transform_4(%arg0: i32) -> (i32, i32) {
    %c0_i32 = arith.constant 0 : i32
    %c0_i32_0 = arith.constant 0 : i32
    %c0_i32_1 = arith.constant 0 : i32
    return %c0_i32, %c0_i32_0 : i32, i32
  }
  func.func @transform_5(%arg0: i32) -> (i32, i32) {
    %c0_i32 = arith.constant 0 : i32
    %c0_i32_0 = arith.constant 0 : i32
    %c0_i32_1 = arith.constant 0 : i32
    return %c0_i32, %c0_i32_0 : i32, i32
  }
  func.func @transform_6(%arg0: i32) -> (i32, i32) {
    %c0_i32 = arith.constant 0 : i32
    %c0_i32_0 = arith.constant 0 : i32
    %c0_i32_1 = arith.constant 0 : i32
    return %c0_i32, %c0_i32_0 : i32, i32
  }
  func.func @transform_7(%arg0: i32) -> (i32, i32) {
    %c0_i32 = arith.constant 0 : i32
    %c0_i32_0 = arith.constant 0 : i32
    %c0_i32_1 = arith.constant 0 : i32
    return %c0_i32, %c0_i32_0 : i32, i32
  }
  func.func @transform_8(%arg0: i32) -> (i32, i32) {
    %c0_i32 = arith.constant 0 : i32
    %c0_i32_0 = arith.constant 0 : i32
    %c0_i32_1 = arith.constant 0 : i32
    return %c0_i32, %c0_i32_0 : i32, i32
  }
  func.func @transform_9(%arg0: i32) -> (i32, i32) {
    %c0_i32 = arith.constant 0 : i32
    %c0_i32_0 = arith.constant 0 : i32
    %c0_i32_1 = arith.constant 0 : i32
    return %c0_i32, %c0_i32_0 : i32, i32
  }
  func.func @transform_10(%arg0: i32) -> (i32, i32) {
    %c0_i32 = arith.constant 0 : i32
    %c0_i32_0 = arith.constant 0 : i32
    %c0_i32_1 = arith.constant 0 : i32
    return %c0_i32, %c0_i32_0 : i32, i32
  }
  func.func @transform_11(%arg0: i32) -> (i32, i32) {
    %c0_i32 = arith.constant 0 : i32
    %c0_i32_0 = arith.constant 0 : i32
    %c0_i32_1 = arith.constant 0 : i32
    return %c0_i32, %c0_i32_0 : i32, i32
  }
  func.func @transform_12(%arg0: i32) -> (i32, i32) {
    %c0_i32 = arith.constant 0 : i32
    %c0_i32_0 = arith.constant 0 : i32
    %c0_i32_1 = arith.constant 0 : i32
    return %c0_i32, %c0_i32_0 : i32, i32
  }
  func.func @transform_13(%arg0: i32) -> (i32, i32) {
    %c0_i32 = arith.constant 0 : i32
    %c0_i32_0 = arith.constant 0 : i32
    return %arg0, %c0_i32 : i32, i32
  }
}

</mosaic_0001>

<llo_original>
// kernel: tpu_custom_call.1
$region0: #{tpu_custom_call.1}
  #allocation0 [shape = 'u32[]', space=smem, size = 0x4, offset = 0x4, fixed_abs, tag = 'smem constant byte address 0x4 - core index']
  #allocation1 [shape = 'u32[144,128]{1,0:T(1,128)}', space=vmem, size = 0x12000, scoped, tag = 'internal scratch']
  %s0 = inlined_call_operand.vmem [shape: f32[20,16,16], index: 0, kind: input, shape index: {}]
  %s1 = inlined_call_operand.vmem [shape: f32[160,160], index: 1, kind: input, shape index: {}]
  %s2 = inlined_call_operand.vmem [shape: f32[160,1], index: 2, kind: input, shape index: {}]
  %s3 = inlined_call_operand.vmem [shape: f32[16,48], index: 3, kind: input, shape index: {}]
  %s4 = inlined_call_operand.vmem [shape: f32[1,16], index: 4, kind: input, shape index: {}]
  %s5 = inlined_call_operand.vmem [shape: f32[1,16], index: 5, kind: input, shape index: {}]
  %s6 = inlined_call_operand.vmem [shape: f32[1,16], index: 6, kind: input, shape index: {}]
  %s7 = inlined_call_operand.vmem [shape: f32[16,24], index: 7, kind: input, shape index: {}]
  %s8 = inlined_call_operand.vmem [shape: f32[1,8], index: 8, kind: input, shape index: {}]
  %s9 = inlined_call_operand.vmem [shape: f32[1,8], index: 9, kind: input, shape index: {}]
  %s10 = inlined_call_operand.vmem [shape: f32[1,8], index: 10, kind: input, shape index: {}]
  %s11 = inlined_call_operand.vmem [shape: f32[8,48], index: 11, kind: input, shape index: {}]
  %s12 = inlined_call_operand.vmem [shape: f32[1,8], index: 12, kind: input, shape index: {}]
  %s13 = inlined_call_operand.vmem [shape: f32[16,8], index: 13, kind: output, shape index: {}]
  %s14 = sld [smem:[#allocation0]]
  $region123: #{tpu_custom_call.1} parent=0
    _
  %s16 = ssub.s32 1, %s14
  %s17 = scalar_select 0, %s16, %s14
  $region1: #{tpu_custom_call.1} parent=0
    #allocation2 [shape = 'u8[163840]{0}', space=vmem, size = 0x28000, scoped, tag = 'input window, operand 0']
    loop: start=0, step=1, limit=4
    $region2: #{tpu_custom_call.1} parent=1 // loop_pre_header
      _
    $region3: #{tpu_custom_call.1} parent=1 // loop_header
      %s19 = sphi 0, %s23
      %p20 = scmp.ge.s32.totalorder %s19, 4
      %s29 = sphi 0, %s31
      %s32 = sphi 0, %s29
      %s33 = sphi 0, %s32
      %s49 = sphi 0, %s33
      %s53 = sphi 0, %s53
      %s55 = sphi 0, %s53
      %s56 = sphi 0, %s55
      %s70 = sphi 0, %s56
      %s74 = sphi 0, %s74
      %s76 = sphi 0, %s74
      %s77 = sphi 0, %s76
      %s91 = sphi 0, %s77
      %s95 = sphi 0, %s95
      %s97 = sphi 0, %s95
      %s98 = sphi 0, %s97
      %s112 = sphi 0, %s98
      %s116 = sphi 0, %s116
      %s118 = sphi 0, %s116
      %s119 = sphi 0, %s118
      %s133 = sphi 0, %s119
      %s137 = sphi 0, %s137
      %s139 = sphi 0, %s137
      %s140 = sphi 0, %s139
      %s154 = sphi 0, %s140
      %s158 = sphi 0, %s158
      %s160 = sphi 0, %s158
      %s161 = sphi 0, %s160
      %s175 = sphi 0, %s161
      %s179 = sphi 0, %s179
      %s181 = sphi 0, %s179
      %s182 = sphi 0, %s181
      %s196 = sphi 0, %s182
      %s200 = sphi 0, %s200
      %s202 = sphi 0, %s200
      %s203 = sphi 0, %s202
      %s217 = sphi 0, %s203
      %s221 = sphi 0, %s221
      %s223 = sphi 0, %s221
      %s224 = sphi 0, %s223
      %s238 = sphi 0, %s224
      %s242 = sphi 0, %s242
      %s244 = sphi 0, %s242
      %s245 = sphi 0, %s244
      %s259 = sphi 0, %s245
      %s263 = sphi 0, %s263
      %s265 = sphi 0, %s263
      %s266 = sphi 0, %s265
      %s280 = sphi 0, %s266
      %s284 = sphi 0, %s284
      %s286 = sphi 0, %s284
      %s287 = sphi 0, %s286
      %s301 = sphi 0, %s287
      %s307 = sphi 0, %s309
      %s310 = sphi 0, %s307
      %s311 = sphi 0, %s310
      %s327 = sphi 0, %s311
    $region4: #{tpu_custom_call.1} parent=1 // loop_header_branch
      %22 = sbr.rel (%p20) target = $region8
    $region5: #{tpu_custom_call.1} parent=1 // loop_body
      %s24 = ssub.s32 %s19, 1
      %s25 = ssub.s32 %s19, 2
      %s26 = sadd.s32 %s19, 1
      %s27 = ssub.s32 %s19, %s26
      %p28 = scmp.eq.s32.totalorder %s27, 0
      %s30 = sadd.s32 %s29, 1
      %s31 = scalar_select %p28, %s29, %s30
      %p34 = pneg %p28
      %p35 = scmp.eq.s32.totalorder %s19, 1
      %p36 = por %p34, %p35
      %p37 = scmp.ne.s32.totalorder %s29, %s32
      %p38 = scmp.eq.s32.totalorder %s19, 0
      %p39 = por %p37, %p38
      %p40 = scmp.ne.s32.totalorder %s29, %s32
      %p41 = scmp.eq.s32.totalorder %s24, 1
      %p42 = por %p40, %p41
      %p43 = scmp.ne.s32.totalorder %s32, %s33
      %p44 = scmp.eq.s32.totalorder %s24, 0
      %p45 = por %p43, %p44
      %p46 = scmp.ne.s32.totalorder %s32, %s33
      %p47 = scmp.eq.s32.totalorder %s25, 1
      %p48 = por %p46, %p47
      %p50 = scmp.ne.s32.totalorder %s33, %s49
      %p51 = scmp.eq.s32.totalorder %s25, 0
      %p52 = por %p50, %p51
      %s54 = sadd.s32 %s53, 1
      %p57 = scmp.eq.s32.totalorder %s19, 1
      %p58 = scmp.ne.s32.totalorder %s53, %s55
      %p59 = scmp.eq.s32.totalorder %s19, 0
      %p60 = por %p58, %p59
      %p61 = scmp.ne.s32.totalorder %s53, %s55
      %p62 = scmp.eq.s32.totalorder %s24, 1
      %p63 = por %p61, %p62
      %p64 = scmp.ne.s32.totalorder %s55, %s56
      %p65 = scmp.eq.s32.totalorder %s24, 0
      %p66 = por %p64, %p65
      %p67 = scmp.ne.s32.totalorder %s55, %s56
      %p68 = scmp.eq.s32.totalorder %s25, 1
      %p69 = por %p67, %p68
      %p71 = scmp.ne.s32.totalorder %s56, %s70
      %p72 = scmp.eq.s32.totalorder %s25, 0
      %p73 = por %p71, %p72
      %s75 = sadd.s32 %s74, 1
      %p78 = scmp.eq.s32.totalorder %s19, 1
      %p79 = scmp.ne.s32.totalorder %s74, %s76
      %p80 = scmp.eq.s32.totalorder %s19, 0
      %p81 = por %p79, %p80
      %p82 = scmp.ne.s32.totalorder %s74, %s76
      %p83 = scmp.eq.s32.totalorder %s24, 1
      %p84 = por %p82, %p83
      %p85 = scmp.ne.s32.totalorder %s76, %s77
      %p86 = scmp.eq.s32.totalorder %s24, 0
      %p87 = por %p85, %p86
      %p88 = scmp.ne.s32.totalorder %s76, %s77
      %p89 = scmp.eq.s32.totalorder %s25, 1
      %p90 = por %p88, %p89
      %p92 = scmp.ne.s32.totalorder %s77, %s91
      %p93 = scmp.eq.s32.totalorder %s25, 0
      %p94 = por %p92, %p93
      %s96 = sadd.s32 %s95, 1
      %p99 = scmp.eq.s32.totalorder %s19, 1
      %p100 = scmp.ne.s32.totalorder %s95, %s97
      %p101 = scmp.eq.s32.totalorder %s19, 0
      %p102 = por %p100, %p101
      %p103 = scmp.ne.s32.totalorder %s95, %s97
      %p104 = scmp.eq.s32.totalorder %s24, 1
      %p105 = por %p103, %p104
      %p106 = scmp.ne.s32.totalorder %s97, %s98
      %p107 = scmp.eq.s32.totalorder %s24, 0
      %p108 = por %p106, %p107
      %p109 = scmp.ne.s32.totalorder %s97, %s98
      %p110 = scmp.eq.s32.totalorder %s25, 1
      %p111 = por %p109, %p110
      %p113 = scmp.ne.s32.totalorder %s98, %s112
      %p114 = scmp.eq.s32.totalorder %s25, 0
      %p115 = por %p113, %p114
      %s117 = sadd.s32 %s116, 1
      %p120 = scmp.eq.s32.totalorder %s19, 1
      %p121 = scmp.ne.s32.totalorder %s116, %s118
      %p122 = scmp.eq.s32.totalorder %s19, 0
      %p123 = por %p121, %p122
      %p124 = scmp.ne.s32.totalorder %s116, %s118
      %p125 = scmp.eq.s32.totalorder %s24, 1
      %p126 = por %p124, %p125
      %p127 = scmp.ne.s32.totalorder %s118, %s119
      %p128 = scmp.eq.s32.totalorder %s24, 0
      %p129 = por %p127, %p128
      %p130 = scmp.ne.s32.totalorder %s118, %s119
      %p131 = scmp.eq.s32.totalorder %s25, 1
      %p132 = por %p130, %p131
      %p134 = scmp.ne.s32.totalorder %s119, %s133
      %p135 = scmp.eq.s32.totalorder %s25, 0
      %p136 = por %p134, %p135
      %s138 = sadd.s32 %s137, 1
      %p141 = scmp.eq.s32.totalorder %s19, 1
      %p142 = scmp.ne.s32.totalorder %s137, %s139
      %p143 = scmp.eq.s32.totalorder %s19, 0
      %p144 = por %p142, %p143
      %p145 = scmp.ne.s32.totalorder %s137, %s139
      %p146 = scmp.eq.s32.totalorder %s24, 1
      %p147 = por %p145, %p146
      %p148 = scmp.ne.s32.totalorder %s139, %s140
      %p149 = scmp.eq.s32.totalorder %s24, 0
      %p150 = por %p148, %p149
      %p151 = scmp.ne.s32.totalorder %s139, %s140
      %p152 = scmp.eq.s32.totalorder %s25, 1
      %p153 = por %p151, %p152
      %p155 = scmp.ne.s32.totalorder %s140, %s154
      %p156 = scmp.eq.s32.totalorder %s25, 0
      %p157 = por %p155, %p156
      %s159 = sadd.s32 %s158, 1
      %p162 = scmp.eq.s32.totalorder %s19, 1
      %p163 = scmp.ne.s32.totalorder %s158, %s160
      %p164 = scmp.eq.s32.totalorder %s19, 0
      %p165 = por %p163, %p164
      %p166 = scmp.ne.s32.totalorder %s158, %s160
      %p167 = scmp.eq.s32.totalorder %s24, 1
      %p168 = por %p166, %p167
      %p169 = scmp.ne.s32.totalorder %s160, %s161
      %p170 = scmp.eq.s32.totalorder %s24, 0
      %p171 = por %p169, %p170
      %p172 = scmp.ne.s32.totalorder %s160, %s161
      %p173 = scmp.eq.s32.totalorder %s25, 1
      %p174 = por %p172, %p173
      %p176 = scmp.ne.s32.totalorder %s161, %s175
      %p177 = scmp.eq.s32.totalorder %s25, 0
      %p178 = por %p176, %p177
      %s180 = sadd.s32 %s179, 1
      %p183 = scmp.eq.s32.totalorder %s19, 1
      %p184 = scmp.ne.s32.totalorder %s179, %s181
      %p185 = scmp.eq.s32.totalorder %s19, 0
      %p186 = por %p184, %p185
      %p187 = scmp.ne.s32.totalorder %s179, %s181
      %p188 = scmp.eq.s32.totalorder %s24, 1
      %p189 = por %p187, %p188
      %p190 = scmp.ne.s32.totalorder %s181, %s182
      %p191 = scmp.eq.s32.totalorder %s24, 0
      %p192 = por %p190, %p191
      %p193 = scmp.ne.s32.totalorder %s181, %s182
      %p194 = scmp.eq.s32.totalorder %s25, 1
      %p195 = por %p193, %p194
      %p197 = scmp.ne.s32.totalorder %s182, %s196
      %p198 = scmp.eq.s32.totalorder %s25, 0
      %p199 = por %p197, %p198
      %s201 = sadd.s32 %s200, 1
      %p204 = scmp.eq.s32.totalorder %s19, 1
      %p205 = scmp.ne.s32.totalorder %s200, %s202
      %p206 = scmp.eq.s32.totalorder %s19, 0
      %p207 = por %p205, %p206
      %p208 = scmp.ne.s32.totalorder %s200, %s202
      %p209 = scmp.eq.s32.totalorder %s24, 1
      %p210 = por %p208, %p209
      %p211 = scmp.ne.s32.totalorder %s202, %s203
      %p212 = scmp.eq.s32.totalorder %s24, 0
      %p213 = por %p211, %p212
      %p214 = scmp.ne.s32.totalorder %s202, %s203
      %p215 = scmp.eq.s32.totalorder %s25, 1
      %p216 = por %p214, %p215
      %p218 = scmp.ne.s32.totalorder %s203, %s217
      %p219 = scmp.eq.s32.totalorder %s25, 0
      %p220 = por %p218, %p219
      %s222 = sadd.s32 %s221, 1
      %p225 = scmp.eq.s32.totalorder %s19, 1
      %p226 = scmp.ne.s32.totalorder %s221, %s223
      %p227 = scmp.eq.s32.totalorder %s19, 0
      %p228 = por %p226, %p227
      %p229 = scmp.ne.s32.totalorder %s221, %s223
      %p230 = scmp.eq.s32.totalorder %s24, 1
      %p231 = por %p229, %p230
      %p232 = scmp.ne.s32.totalorder %s223, %s224
      %p233 = scmp.eq.s32.totalorder %s24, 0
      %p234 = por %p232, %p233
      %p235 = scmp.ne.s32.totalorder %s223, %s224
      %p236 = scmp.eq.s32.totalorder %s25, 1
      %p237 = por %p235, %p236
      %p239 = scmp.ne.s32.totalorder %s224, %s238
      %p240 = scmp.eq.s32.totalorder %s25, 0
      %p241 = por %p239, %p240
      %s243 = sadd.s32 %s242, 1
      %p246 = scmp.eq.s32.totalorder %s19, 1
      %p247 = scmp.ne.s32.totalorder %s242, %s244
      %p248 = scmp.eq.s32.totalorder %s19, 0
      %p249 = por %p247, %p248
      %p250 = scmp.ne.s32.totalorder %s242, %s244
      %p251 = scmp.eq.s32.totalorder %s24, 1
      %p252 = por %p250, %p251
      %p253 = scmp.ne.s32.totalorder %s244, %s245
      %p254 = scmp.eq.s32.totalorder %s24, 0
      %p255 = por %p253, %p254
      %p256 = scmp.ne.s32.totalorder %s244, %s245
      %p257 = scmp.eq.s32.totalorder %s25, 1
      %p258 = por %p256, %p257
      %p260 = scmp.ne.s32.totalorder %s245, %s259
      %p261 = scmp.eq.s32.totalorder %s25, 0
      %p262 = por %p260, %p261
      %s264 = sadd.s32 %s263, 1
      %p267 = scmp.eq.s32.totalorder %s19, 1
      %p268 = scmp.ne.s32.totalorder %s263, %s265
      %p269 = scmp.eq.s32.totalorder %s19, 0
      %p270 = por %p268, %p269
      %p271 = scmp.ne.s32.totalorder %s263, %s265
      %p272 = scmp.eq.s32.totalorder %s24, 1
      %p273 = por %p271, %p272
      %p274 = scmp.ne.s32.totalorder %s265, %s266
      %p275 = scmp.eq.s32.totalorder %s24, 0
      %p276 = por %p274, %p275
      %p277 = scmp.ne.s32.totalorder %s265, %s266
      %p278 = scmp.eq.s32.totalorder %s25, 1
      %p279 = por %p277, %p278
      %p281 = scmp.ne.s32.totalorder %s266, %s280
      %p282 = scmp.eq.s32.totalorder %s25, 0
      %p283 = por %p281, %p282
      %s285 = sadd.s32 %s284, 1
      %p288 = scmp.eq.s32.totalorder %s19, 1
      %p289 = scmp.ne.s32.totalorder %s284, %s286
      %p290 = scmp.eq.s32.totalorder %s19, 0
      %p291 = por %p289, %p290
      %p292 = scmp.ne.s32.totalorder %s284, %s286
      %p293 = scmp.eq.s32.totalorder %s24, 1
      %p294 = por %p292, %p293
      %p295 = scmp.ne.s32.totalorder %s286, %s287
      %p296 = scmp.eq.s32.totalorder %s24, 0
      %p297 = por %p295, %p296
      %p298 = scmp.ne.s32.totalorder %s286, %s287
      %p299 = scmp.eq.s32.totalorder %s25, 1
      %p300 = por %p298, %p299
      %p302 = scmp.ne.s32.totalorder %s287, %s301
      %p303 = scmp.eq.s32.totalorder %s25, 0
      %p304 = por %p302, %p303
      %s305 = ssub.s32 %s19, %s26
      %p306 = scmp.eq.s32.totalorder %s305, 0
      %s308 = sadd.s32 %s307, 1
      %s309 = scalar_select %p306, %s307, %s308
      %p312 = pneg %p306
      %p313 = scmp.eq.s32.totalorder %s19, 1
      %p314 = por %p312, %p313
      %p315 = scmp.ne.s32.totalorder %s307, %s310
      %p316 = scmp.eq.s32.totalorder %s19, 0
      %p317 = por %p315, %p316
      %p318 = scmp.ne.s32.totalorder %s307, %s310
      %p319 = scmp.eq.s32.totalorder %s24, 1
      %p320 = por %p318, %p319
      %p321 = scmp.ne.s32.totalorder %s310, %s311
      %p322 = scmp.eq.s32.totalorder %s24, 0
      %p323 = por %p321, %p322
      %p324 = scmp.ne.s32.totalorder %s310, %s311
      %p325 = scmp.eq.s32.totalorder %s25, 1
      %p326 = por %p324, %p325
      %p328 = scmp.ne.s32.totalorder %s311, %s327
      %p329 = scmp.eq.s32.totalorder %s25, 0
      %p330 = por %p328, %p329
      %p331 = scmp.le.s32.totalorder 1, %s19
      %p332 = scmp.lt.s32.totalorder %s19, 3
      %p333 = pnand %p331, %p332
      %p334 = pneg %p333
      // Predicated region
      $region9: #{tpu_custom_call.1} parent=5 // pred_check
        _
      $region10: #{tpu_custom_call.1} parent=5 // pred_check_branch
        %336 = sbr.rel (%p333) target = $region12
      $region11: #{tpu_custom_call.1} parent=5 // pred_region
        %s337 = ssub.s32 %s19, 1
        // Predicated region
        $region13: #{tpu_custom_call.1} parent=11 // pred_check
          %p338 = pneg %p66
        $region14: #{tpu_custom_call.1} parent=11 // pred_check_branch
          %340 = sbr.rel (%p338) target = $region16
        $region15: #{tpu_custom_call.1} parent=11 // pred_region
          _
        $region16: #{tpu_custom_call.1} parent=11 // pred_fallthru
          _
        // Predicated region
        $region17: #{tpu_custom_call.1} parent=11 // pred_check
          %p341 = pneg %p87
        $region18: #{tpu_custom_call.1} parent=11 // pred_check_branch
          %343 = sbr.rel (%p341) target = $region20
        $region19: #{tpu_custom_call.1} parent=11 // pred_region
          _
        $region20: #{tpu_custom_call.1} parent=11 // pred_fallthru
          _
        // Predicated region
        $region21: #{tpu_custom_call.1} parent=11 // pred_check
          %p344 = pneg %p108
        $region22: #{tpu_custom_call.1} parent=11 // pred_check_branch
          %346 = sbr.rel (%p344) target = $region24
        $region23: #{tpu_custom_call.1} parent=11 // pred_region
          _
        $region24: #{tpu_custom_call.1} parent=11 // pred_fallthru
          _
        // Predicated region
        $region25: #{tpu_custom_call.1} parent=11 // pred_check
          %p347 = pneg %p129
        $region26: #{tpu_custom_call.1} parent=11 // pred_check_branch
          %349 = sbr.rel (%p347) target = $region28
        $region27: #{tpu_custom_call.1} parent=11 // pred_region
          _
        $region28: #{tpu_custom_call.1} parent=11 // pred_fallthru
          _
        // Predicated region
        $region29: #{tpu_custom_call.1} parent=11 // pred_check
          %p350 = pneg %p150
        $region30: #{tpu_custom_call.1} parent=11 // pred_check_branch
          %352 = sbr.rel (%p350) target = $region32
        $region31: #{tpu_custom_call.1} parent=11 // pred_region
          _
        $region32: #{tpu_custom_call.1} parent=11 // pred_fallthru
          _
        // Predicated region
        $region33: #{tpu_custom_call.1} parent=11 // pred_check
          %p353 = pneg %p171
        $region34: #{tpu_custom_call.1} parent=11 // pred_check_branch
          %355 = sbr.rel (%p353) target = $region36
        $region35: #{tpu_custom_call.1} parent=11 // pred_region
          _
        $region36: #{tpu_custom_call.1} parent=11 // pred_fallthru
          _
        // Predicated region
        $region37: #{tpu_custom_call.1} parent=11 // pred_check
          %p356 = pneg %p192
        $region38: #{tpu_custom_call.1} parent=11 // pred_check_branch
          %358 = sbr.rel (%p356) target = $region40
        $region39: #{tpu_custom_call.1} parent=11 // pred_region
          _
        $region40: #{tpu_custom_call.1} parent=11 // pred_fallthru
          _
        // Predicated region
        $region41: #{tpu_custom_call.1} parent=11 // pred_check
          %p359 = pneg %p213
        $region42: #{tpu_custom_call.1} parent=11 // pred_check_branch
          %361 = sbr.rel (%p359) target = $region44
        $region43: #{tpu_custom_call.1} parent=11 // pred_region
          _
        $region44: #{tpu_custom_call.1} parent=11 // pred_fallthru
          _
        // Predicated region
        $region45: #{tpu_custom_call.1} parent=11 // pred_check
          %p362 = pneg %p234
        $region46: #{tpu_custom_call.1} parent=11 // pred_check_branch
          %364 = sbr.rel (%p362) target = $region48
        $region47: #{tpu_custom_call.1} parent=11 // pred_region
          _
        $region48: #{tpu_custom_call.1} parent=11 // pred_fallthru
          _
        // Predicated region
        $region49: #{tpu_custom_call.1} parent=11 // pred_check
          %p365 = pneg %p255
        $region50: #{tpu_custom_call.1} parent=11 // pred_check_branch
          %367 = sbr.rel (%p365) target = $region52
        $region51: #{tpu_custom_call.1} parent=11 // pred_region
          _
        $region52: #{tpu_custom_call.1} parent=11 // pred_fallthru
          _
        // Predicated region
        $region53: #{tpu_custom_call.1} parent=11 // pred_check
          %p368 = pneg %p276
        $region54: #{tpu_custom_call.1} parent=11 // pred_check_branch
          %370 = sbr.rel (%p368) target = $region56
        $region55: #{tpu_custom_call.1} parent=11 // pred_region
          _
        $region56: #{tpu_custom_call.1} parent=11 // pred_fallthru
          _
        // Predicated region
        $region57: #{tpu_custom_call.1} parent=11 // pred_check
          %p371 = pneg %p297
        $region58: #{tpu_custom_call.1} parent=11 // pred_check_branch
          %373 = sbr.rel (%p371) target = $region60
        $region59: #{tpu_custom_call.1} parent=11 // pred_region
          _
        $region60: #{tpu_custom_call.1} parent=11 // pred_fallthru
          _
      $region12: #{tpu_custom_call.1} parent=5 // pred_fallthru
        _
      %p374 = scmp.lt.s32.totalorder %s19, 2
      // Predicated region
      $region61: #{tpu_custom_call.1} parent=5 // pred_check
        %p375 = pneg %p374
      $region62: #{tpu_custom_call.1} parent=5 // pred_check_branch
        %377 = sbr.rel (%p375) target = $region64
      $region63: #{tpu_custom_call.1} parent=5 // pred_region
        // Predicated region
        $region65: #{tpu_custom_call.1} parent=63 // pred_check
          %p378 = pneg %p39
        $region66: #{tpu_custom_call.1} parent=63 // pred_check_branch
          %380 = sbr.rel (%p378) target = $region68
        $region67: #{tpu_custom_call.1} parent=63 // pred_region
          %s381 = sand.u32 %s29, 1
          %s382 = sand.u32 %s29, 1
          %s383 = smul.addr %s382, 160
          %s384 = scalar_lea.vmem [#allocation2], %s383
          %s385 = smul.addr %s19, 8
          %s386 = scalar_lea.vmem %s0, %s385
          // Predicated region
          $region69: #{tpu_custom_call.1} parent=67 // pred_check
            _
          $region70: #{tpu_custom_call.1} parent=67 // pred_check_branch
            %388 = sbr.rel (0) target = $region72
          $region71: #{tpu_custom_call.1} parent=67 // pred_region
            // Predicated region
            $region73: #{tpu_custom_call.1} parent=71 // pred_check
              _
            $region74: #{tpu_custom_call.1} parent=71 // pred_check_branch
              %390 = sbr.rel (0) target = $region76
            $region75: #{tpu_custom_call.1} parent=71 // pred_region
              // Predicated region
              $region88: #{tpu_custom_call.1} parent=75 // pred_check
                _
              $region89: #{tpu_custom_call.1} parent=75 // pred_check_branch
                %443 = sbr.rel (0) target = $region91
              $region90: #{tpu_custom_call.1} parent=75 // pred_region
                loop: start=0, step=1, limit=1
                $region92: #{tpu_custom_call.1} parent=90 // loop_pre_header
                  _
                $region93: #{tpu_custom_call.1} parent=90 // loop_header
                  %s445 = sphi 0, %s449
                  %p446 = scmp.ge.s32.totalorder %s445, 1
                  %s450 = sphi %s386, %s386
                  %s451 = sphi %s384, %s384
                $region94: #{tpu_custom_call.1} parent=90 // loop_header_branch
                  %448 = sbr.rel (%p446) target = $region98
                $region95: #{tpu_custom_call.1} parent=90 // loop_body
                  %v452 = vld [vmem:[%s450] sm:$0xff]
                  %453 = vst [vmem:[%s451] sm:$0xff] %v452
                  %v454 = vld [vmem:[%s450 + $0x10] sm:$0xff]
                  %455 = vst [vmem:[%s451 + $0x8] sm:$0xff] %v454
                  %v456 = vld [vmem:[%s450 + $0x20] sm:$0xff]
                  %457 = vst [vmem:[%s451 + $0x10] sm:$0xff] %v456
                  %v458 = vld [vmem:[%s450 + $0x30] sm:$0xff]
                  %459 = vst [vmem:[%s451 + $0x18] sm:$0xff] %v458
                  %v460 = vld [vmem:[%s450 + $0x40] sm:$0xff]
                  %461 = vst [vmem:[%s451 + $0x20] sm:$0xff] %v460
                  %v462 = vld [vmem:[%s450 + $0x50] sm:$0xff]
                  %463 = vst [vmem:[%s451 + $0x28] sm:$0xff] %v462
                  %v464 = vld [vmem:[%s450 + $0x60] sm:$0xff]
                  %465 = vst [vmem:[%s451 + $0x30] sm:$0xff] %v464
                  %v466 = vld [vmem:[%s450 + $0x70] sm:$0xff]
                  %467 = vst [vmem:[%s451 + $0x38] sm:$0xff] %v466
                  %v468 = vld [vmem:[%s450 + $0x80] sm:$0xff]
                  %469 = vst [vmem:[%s451 + $0x40] sm:$0xff] %v468
                  %v470 = vld [vmem:[%s450 + $0x90] sm:$0xff]
                  %471 = vst [vmem:[%s451 + $0x48] sm:$0xff] %v470
                  %v472 = vld [vmem:[%s450 + $0xa0] sm:$0xff]
                  %473 = vst [vmem:[%s451 + $0x50] sm:$0xff] %v472
                  %v474 = vld [vmem:[%s450 + $0xb0] sm:$0xff]
                  %475 = vst [vmem:[%s451 + $0x58] sm:$0xff] %v474
                  %v476 = vld [vmem:[%s450 + $0xc0] sm:$0xff]
                  %477 = vst [vmem:[%s451 + $0x60] sm:$0xff] %v476
                  %v478 = vld [vmem:[%s450 + $0xd0] sm:$0xff]
                  %479 = vst [vmem:[%s451 + $0x68] sm:$0xff] %v478
                  %v480 = vld [vmem:[%s450 + $0xe0] sm:$0xff]
                  %481 = vst [vmem:[%s451 + $0x70] sm:$0xff] %v480
                  %v482 = vld [vmem:[%s450 + $0xf0] sm:$0xff]
                  %483 = vst [vmem:[%s451 + $0x78] sm:$0xff] %v482
                  %v484 = vld [vmem:[%s450 + $0x100] sm:$0xff]
                  %485 = vst [vmem:[%s451 + $0x80] sm:$0xff] %v484
                  %v486 = vld [vmem:[%s450 + $0x110] sm:$0xff]
                  %487 = vst [vmem:[%s451 + $0x88] sm:$0xff] %v486
                  %v488 = vld [vmem:[%s450 + $0x120] sm:$0xff]
                  %489 = vst [vmem:[%s451 + $0x90] sm:$0xff] %v488
                  %v490 = vld [vmem:[%s450 + $0x130] sm:$0xff]
                  %491 = vst [vmem:[%s451 + $0x98] sm:$0xff] %v490
                $region96: #{tpu_custom_call.1} parent=90 // loop_footer
                  %s449 = sadd.s32 1, %s445
                $region97: #{tpu_custom_call.1} parent=90 // loop_footer_branch
                  %444 = sbr.rel target = $region93
                $region98: #{tpu_custom_call.1} parent=90 // loop_exit
                  _
              $region91: #{tpu_custom_call.1} parent=75 // pred_fallthru
                _
              // Predicated region
              $region99: #{tpu_custom_call.1} parent=75 // pred_check
                _
              $region100: #{tpu_custom_call.1} parent=75 // pred_check_branch
                %493 = sbr.rel target = $region102
              $region101: #{tpu_custom_call.1} parent=75 // pred_region
                _
              $region102: #{tpu_custom_call.1} parent=75 // pred_fallthru
                _
            $region76: #{tpu_custom_call.1} parent=71 // pred_fallthru
              _
            // Predicated region
            $region77: #{tpu_custom_call.1} parent=71 // pred_check
              _
            $region78: #{tpu_custom_call.1} parent=71 // pred_check_branch
              %392 = sbr.rel target = $region80
            $region79: #{tpu_custom_call.1} parent=71 // pred_region
              loop: start=0, step=1, limit=1
              $region81: #{tpu_custom_call.1} parent=79 // loop_pre_header
                _
              $region82: #{tpu_custom_call.1} parent=79 // loop_header
                %s395 = sphi 0, %s399
                %p396 = scmp.ge.s32.totalorder %s395, 1
                %s400 = sphi %s386, %s386
                %s401 = sphi %s384, %s384
              $region83: #{tpu_custom_call.1} parent=79 // loop_header_branch
                %398 = sbr.rel (%p396) target = $region87
              $region84: #{tpu_custom_call.1} parent=79 // loop_body
                %v402 = vld [vmem:[%s400] sm:$0xff]
                %403 = vst [vmem:[%s401] sm:$0xff] %v402
                %v404 = vld [vmem:[%s400 + $0x10] sm:$0xff]
                %405 = vst [vmem:[%s401 + $0x8] sm:$0xff] %v404
                %v406 = vld [vmem:[%s400 + $0x20] sm:$0xff]
                %407 = vst [vmem:[%s401 + $0x10] sm:$0xff] %v406
                %v408 = vld [vmem:[%s400 + $0x30] sm:$0xff]
                %409 = vst [vmem:[%s401 + $0x18] sm:$0xff] %v408
                %v410 = vld [vmem:[%s400 + $0x40] sm:$0xff]
                %411 = vst [vmem:[%s401 + $0x20] sm:$0xff] %v410
                %v412 = vld [vmem:[%s400 + $0x50] sm:$0xff]
                %413 = vst [vmem:[%s401 + $0x28] sm:$0xff] %v412
                %v414 = vld [vmem:[%s400 + $0x60] sm:$0xff]
                %415 = vst [vmem:[%s401 + $0x30] sm:$0xff] %v414
                %v416 = vld [vmem:[%s400 + $0x70] sm:$0xff]
                %417 = vst [vmem:[%s401 + $0x38] sm:$0xff] %v416
                %v418 = vld [vmem:[%s400 + $0x80] sm:$0xff]
                %419 = vst [vmem:[%s401 + $0x40] sm:$0xff] %v418
                %v420 = vld [vmem:[%s400 + $0x90] sm:$0xff]
                %421 = vst [vmem:[%s401 + $0x48] sm:$0xff] %v420
                %v422 = vld [vmem:[%s400 + $0xa0] sm:$0xff]
                %423 = vst [vmem:[%s401 + $0x50] sm:$0xff] %v422
                %v424 = vld [vmem:[%s400 + $0xb0] sm:$0xff]
                %425 = vst [vmem:[%s401 + $0x58] sm:$0xff] %v424
                %v426 = vld [vmem:[%s400 + $0xc0] sm:$0xff]
                %427 = vst [vmem:[%s401 + $0x60] sm:$0xff] %v426
                %v428 = vld [vmem:[%s400 + $0xd0] sm:$0xff]
                %429 = vst [vmem:[%s401 + $0x68] sm:$0xff] %v428
                %v430 = vld [vmem:[%s400 + $0xe0] sm:$0xff]
                %431 = vst [vmem:[%s401 + $0x70] sm:$0xff] %v430
                %v432 = vld [vmem:[%s400 + $0xf0] sm:$0xff]
                %433 = vst [vmem:[%s401 + $0x78] sm:$0xff] %v432
                %v434 = vld [vmem:[%s400 + $0x100] sm:$0xff]
                %435 = vst [vmem:[%s401 + $0x80] sm:$0xff] %v434
                %v436 = vld [vmem:[%s400 + $0x110] sm:$0xff]
                %437 = vst [vmem:[%s401 + $0x88] sm:$0xff] %v436
                %v438 = vld [vmem:[%s400 + $0x120] sm:$0xff]
                %439 = vst [vmem:[%s401 + $0x90] sm:$0xff] %v438
                %v440 = vld [vmem:[%s400 + $0x130] sm:$0xff]
                %441 = vst [vmem:[%s401 + $0x98] sm:$0xff] %v440
              $region85: #{tpu_custom_call.1} parent=79 // loop_footer
                %s399 = sadd.s32 1, %s395
              $region86: #{tpu_custom_call.1} parent=79 // loop_footer_branch
                %394 = sbr.rel target = $region82
              $region87: #{tpu_custom_call.1} parent=79 // loop_exit
                _
            $region80: #{tpu_custom_call.1} parent=71 // pred_fallthru
              _
          $region72: #{tpu_custom_call.1} parent=67 // pred_fallthru
            _
          %494 = vnop
        $region68: #{tpu_custom_call.1} parent=63 // pred_fallthru
          _
      $region64: #{tpu_custom_call.1} parent=5 // pred_fallthru
        _
      %p495 = scmp.le.s32.totalorder 1, %s19
      %p496 = scmp.lt.s32.totalorder %s19, 3
      %p497 = pnand %p495, %p496
      %p498 = pneg %p497
      // Predicated region
      $region103: #{tpu_custom_call.1} parent=5 // pred_check
        _
      $region104: #{tpu_custom_call.1} parent=5 // pred_check_branch
        %500 = sbr.rel (%p497) target = $region106
      $region105: #{tpu_custom_call.1} parent=5 // pred_region
        %s501 = ssub.s32 %s19, 1
        %s502 = sand.u32 %s32, 1
        %s503 = sand.u32 %s32, 1
        %s504 = smul.addr %s503, 160
        %s505 = scalar_lea.vmem [#allocation2], %s504
        // Predicated region
        $region107: #{tpu_custom_call.1} parent=105 // pred_check
          %p506 = pneg %p45
        $region108: #{tpu_custom_call.1} parent=105 // pred_check_branch
          %508 = sbr.rel (%p506) target = $region110
        $region109: #{tpu_custom_call.1} parent=105 // pred_region
          _
        $region110: #{tpu_custom_call.1} parent=105 // pred_fallthru
          _
        %s509 = sand.u32 %s32, 1
        %s510 = sand.u32 %s32, 1
        %s511 = smul.addr %s510, 160
        %s512 = scalar_lea.vmem [#allocation2], %s511
        %p513 = pneg %p45
        %p514 = pneg %p42
        %p515 = pneg %p66
        %p516 = pneg %p63
        %p517 = pneg %p87
        %p518 = pneg %p84
        %p519 = pneg %p108
        %p520 = pneg %p105
        %p521 = pneg %p129
        %p522 = pneg %p126
        %p523 = pneg %p150
        %p524 = pneg %p147
        %p525 = pneg %p171
        %p526 = pneg %p168
        %p527 = pneg %p192
        %p528 = pneg %p189
        %p529 = pneg %p213
        %p530 = pneg %p210
        %p531 = pneg %p234
        %p532 = pneg %p231
        %p533 = pneg %p255
        %p534 = pneg %p252
        %p535 = pneg %p276
        %p536 = pneg %p273
        %p537 = pneg %p297
        %p538 = pneg %p294
        %p539 = pneg %p323
        %p540 = pneg %p320
        %p541 = scmp.lt.s32.totalorder %s24, 1
        %s542 = scalar_select %p541, %s24, 1
        %s543 = smul.addr %s542, 8
        %s544 = scalar_lea.vmem %s13, %s543
        %p545 = scmp.lt.s32.totalorder %s24, 1
        %s546 = scalar_select %p545, %s24, 1
        %s547 = smul.addr %s546, 8
        %s548 = scalar_lea.vmem %s13, %s547
        %v549 = vld [vmem:[%s505] sm:$0xff]
        %v550 = vld [vmem:[%s505 + $0x8] sm:$0xff]
        %v551 = vld [vmem:[%s505 + $0x10] sm:$0xff]
        %v552 = vld [vmem:[%s505 + $0x18] sm:$0xff]
        %v553 = vld [vmem:[%s505 + $0x20] sm:$0xff]
        %v554 = vld [vmem:[%s505 + $0x28] sm:$0xff]
        %v555 = vld [vmem:[%s505 + $0x30] sm:$0xff]
        %v556 = vld [vmem:[%s505 + $0x38] sm:$0xff]
        %v557 = vld [vmem:[%s505 + $0x40] sm:$0xff]
        %v558 = vld [vmem:[%s505 + $0x48] sm:$0xff]
        %v559 = vld [vmem:[%s505 + $0x50] sm:$0xff]
        %v560 = vld [vmem:[%s505 + $0x58] sm:$0xff]
        %v561 = vld [vmem:[%s505 + $0x60] sm:$0xff]
        %v562 = vld [vmem:[%s505 + $0x68] sm:$0xff]
        %v563 = vld [vmem:[%s505 + $0x70] sm:$0xff]
        %v564 = vld [vmem:[%s505 + $0x78] sm:$0xff]
        %v565 = vld [vmem:[%s505 + $0x80] sm:$0xff]
        %v566 = vld [vmem:[%s505 + $0x88] sm:$0xff]
        %v567 = vld [vmem:[%s505 + $0x90] sm:$0xff]
        %v568 = vld [vmem:[%s505 + $0x98] sm:$0xff]
        %v569 = vld [vmem:[%s1] sm:$0xff]
        %v570 = vld [vmem:[%s1 + $0x8] sm:$0xff]
        %v571 = vld [vmem:[%s1 + $0x10] sm:$0xff]
        %v572 = vld [vmem:[%s1 + $0x18] sm:$0xff]
        %v573 = vld [vmem:[%s1 + $0x20] sm:$0xff]
        %v574 = vld [vmem:[%s1 + $0x28] sm:$0xff]
        %v575 = vld [vmem:[%s1 + $0x30] sm:$0xff]
        %v576 = vld [vmem:[%s1 + $0x38] sm:$0xff]
        %v577 = vld [vmem:[%s1 + $0x40] sm:$0xff]
        %v578 = vld [vmem:[%s1 + $0x48] sm:$0xff]
        %v579 = vld [vmem:[%s1 + $0x50] sm:$0xff]
        %v580 = vld [vmem:[%s1 + $0x58] sm:$0xff]
        %v581 = vld [vmem:[%s1 + $0x60] sm:$0xff]
        %v582 = vld [vmem:[%s1 + $0x68] sm:$0xff]
        %v583 = vld [vmem:[%s1 + $0x70] sm:$0xff]
        %v584 = vld [vmem:[%s1 + $0x78] sm:$0xff]
        %v585 = vld [vmem:[%s1 + $0x80] sm:$0xff]
        %v586 = vld [vmem:[%s1 + $0x88] sm:$0xff]
        %v587 = vld [vmem:[%s1 + $0x90] sm:$0xff]
        %v588 = vld [vmem:[%s1 + $0x98] sm:$0xff]
        %v589 = vld [vmem:[%s1 + $0xa0] sm:$0xff]
        %v590 = vld [vmem:[%s1 + $0xa8] sm:$0xff]
        %v591 = vld [vmem:[%s1 + $0xb0] sm:$0xff]
        %v592 = vld [vmem:[%s1 + $0xb8] sm:$0xff]
        %v593 = vld [vmem:[%s1 + $0xc0] sm:$0xff]
        %v594 = vld [vmem:[%s1 + $0xc8] sm:$0xff]
        %v595 = vld [vmem:[%s1 + $0xd0] sm:$0xff]
        %v596 = vld [vmem:[%s1 + $0xd8] sm:$0xff]
        %v597 = vld [vmem:[%s1 + $0xe0] sm:$0xff]
        %v598 = vld [vmem:[%s1 + $0xe8] sm:$0xff]
        %v599 = vld [vmem:[%s1 + $0xf0] sm:$0xff]
        %v600 = vld [vmem:[%s1 + $0xf8] sm:$0xff]
        %v601 = vld [vmem:[%s1 + $0x100] sm:$0xff]
        %v602 = vld [vmem:[%s1 + $0x108] sm:$0xff]
        %v603 = vld [vmem:[%s1 + $0x110] sm:$0xff]
        %v604 = vld [vmem:[%s1 + $0x118] sm:$0xff]
        %v605 = vld [vmem:[%s1 + $0x120] sm:$0xff]
        %v606 = vld [vmem:[%s1 + $0x128] sm:$0xff]
        %v607 = vld [vmem:[%s1 + $0x130] sm:$0xff]
        %v608 = vld [vmem:[%s1 + $0x138] sm:$0xff]
        %v609 = vld [vmem:[%s2] sm:$0xff]
        %v610 = vld [vmem:[%s2 + $0x8] sm:$0xff]
        %v611 = vld [vmem:[%s2 + $0x10] sm:$0xff]
        %v612 = vld [vmem:[%s2 + $0x18] sm:$0xff]
        %v613 = vld [vmem:[%s2 + $0x20] sm:$0xff]
        %v614 = vld [vmem:[%s2 + $0x28] sm:$0xff]
        %v615 = vld [vmem:[%s2 + $0x30] sm:$0xff]
        %v616 = vld [vmem:[%s2 + $0x38] sm:$0xff]
        %v617 = vld [vmem:[%s2 + $0x40] sm:$0xff]
        %v618 = vld [vmem:[%s2 + $0x48] sm:$0xff]
        %v619 = vld [vmem:[%s2 + $0x50] sm:$0xff]
        %v620 = vld [vmem:[%s2 + $0x58] sm:$0xff]
        %v621 = vld [vmem:[%s2 + $0x60] sm:$0xff]
        %v622 = vld [vmem:[%s2 + $0x68] sm:$0xff]
        %v623 = vld [vmem:[%s2 + $0x70] sm:$0xff]
        %v624 = vld [vmem:[%s2 + $0x78] sm:$0xff]
        %v625 = vld [vmem:[%s2 + $0x80] sm:$0xff]
        %v626 = vld [vmem:[%s2 + $0x88] sm:$0xff]
        %v627 = vld [vmem:[%s2 + $0x90] sm:$0xff]
        %v628 = vld [vmem:[%s2 + $0x98] sm:$0xff]
        %630 = vset.pattern.permute.xlu0 0
        %631 = vperm.xlu0 %630, %v609
        %v632 = vpop.permute.xlu0 %631
        %635 = vset.pattern.permute.xlu0 0
        %636 = vperm.xlu0 %635, %v610
        %v637 = vpop.permute.xlu0 %636
        %640 = vset.pattern.permute.xlu0 0
        %641 = vperm.xlu0 %640, %v611
        %v642 = vpop.permute.xlu0 %641
        %645 = vset.pattern.permute.xlu0 0
        %646 = vperm.xlu0 %645, %v612
        %v647 = vpop.permute.xlu0 %646
        %650 = vset.pattern.permute.xlu0 0
        %651 = vperm.xlu0 %650, %v613
        %v652 = vpop.permute.xlu0 %651
        %655 = vset.pattern.permute.xlu0 0
        %656 = vperm.xlu0 %655, %v614
        %v657 = vpop.permute.xlu0 %656
        %660 = vset.pattern.permute.xlu0 0
        %661 = vperm.xlu0 %660, %v615
        %v662 = vpop.permute.xlu0 %661
        %665 = vset.pattern.permute.xlu0 0
        %666 = vperm.xlu0 %665, %v616
        %v667 = vpop.permute.xlu0 %666
        %670 = vset.pattern.permute.xlu0 0
        %671 = vperm.xlu0 %670, %v617
        %v672 = vpop.permute.xlu0 %671
        %675 = vset.pattern.permute.xlu0 0
        %676 = vperm.xlu0 %675, %v618
        %v677 = vpop.permute.xlu0 %676
        %680 = vset.pattern.permute.xlu0 0
        %681 = vperm.xlu0 %680, %v619
        %v682 = vpop.permute.xlu0 %681
        %685 = vset.pattern.permute.xlu0 0
        %686 = vperm.xlu0 %685, %v620
        %v687 = vpop.permute.xlu0 %686
        %690 = vset.pattern.permute.xlu0 0
        %691 = vperm.xlu0 %690, %v621
        %v692 = vpop.permute.xlu0 %691
        %695 = vset.pattern.permute.xlu0 0
        %696 = vperm.xlu0 %695, %v622
        %v697 = vpop.permute.xlu0 %696
        %700 = vset.pattern.permute.xlu0 0
        %701 = vperm.xlu0 %700, %v623
        %v702 = vpop.permute.xlu0 %701
        %705 = vset.pattern.permute.xlu0 0
        %706 = vperm.xlu0 %705, %v624
        %v707 = vpop.permute.xlu0 %706
        %710 = vset.pattern.permute.xlu0 0
        %711 = vperm.xlu0 %710, %v625
        %v712 = vpop.permute.xlu0 %711
        %715 = vset.pattern.permute.xlu0 0
        %716 = vperm.xlu0 %715, %v626
        %v717 = vpop.permute.xlu0 %716
        %720 = vset.pattern.permute.xlu0 0
        %721 = vperm.xlu0 %720, %v627
        %v722 = vpop.permute.xlu0 %721
        %725 = vset.pattern.permute.xlu0 0
        %726 = vperm.xlu0 %725, %v628
        %v727 = vpop.permute.xlu0 %726
        %vm729 = vcmask 261120
        %v731 = vsel %vm729, %v570, 0
        %v734 = vsel %vm729, %v572, 0
        %v737 = vsel %vm729, %v574, 0
        %v740 = vsel %vm729, %v576, 0
        %v743 = vsel %vm729, %v578, 0
        %v746 = vsel %vm729, %v580, 0
        %v749 = vsel %vm729, %v582, 0
        %v752 = vsel %vm729, %v584, 0
        %v755 = vsel %vm729, %v586, 0
        %v758 = vsel %vm729, %v588, 0
        %v761 = vsel %vm729, %v590, 0
        %v764 = vsel %vm729, %v592, 0
        %v767 = vsel %vm729, %v594, 0
        %v770 = vsel %vm729, %v596, 0
        %v773 = vsel %vm729, %v598, 0
        %v776 = vsel %vm729, %v600, 0
        %v779 = vsel %vm729, %v602, 0
        %v782 = vsel %vm729, %v604, 0
        %v785 = vsel %vm729, %v606, 0
        %v788 = vsel %vm729, %v608, 0
        %790 = vmatprep.subr.mxu0 0.0
        %791 = vmatpush1.msra.mxu0 %v549
        %792 = vmatprep.subr.mxu0 0.0
        %793 = vmatpush1.msra.mxu0 %v550
        %794 = vmatprep.subr.mxu0 0.0
        %795 = vmatpush1.msra.mxu0 %v551
        %796 = vmatprep.subr.mxu0 0.0
        %797 = vmatpush1.msra.mxu0 %v552
        %798 = vmatprep.subr.mxu0 0.0
        %799 = vmatpush1.msra.mxu0 %v553
        %800 = vmatprep.subr.mxu0 0.0
        %801 = vmatpush1.msra.mxu0 %v554
        %802 = vmatprep.subr.mxu0 0.0
        %803 = vmatpush1.msra.mxu0 %v555
        %804 = vmatprep.subr.mxu0 0.0
        %805 = vmatpush1.msra.mxu0 %v556
        %806 = vmatprep.subr.mxu0 0.0
        %807 = vmatpush1.msra.mxu0 %v557
        %808 = vmatprep.subr.mxu0 0.0
        %809 = vmatpush1.msra.mxu0 %v558
        %810 = vmatprep.subr.mxu0 0.0
        %811 = vmatpush1.msra.mxu0 %v559
        %812 = vmatprep.subr.mxu0 0.0
        %813 = vmatpush1.msra.mxu0 %v560
        %814 = vmatprep.subr.mxu0 0.0
        %815 = vmatpush1.msra.mxu0 %v561
        %816 = vmatprep.subr.mxu0 0.0
        %817 = vmatpush1.msra.mxu0 %v562
        %818 = vmatprep.subr.mxu0 0.0
        %819 = vmatpush1.msra.mxu0 %v563
        %820 = vmatprep.subr.mxu0 0.0
        %821 = vmatpush1.msra.mxu0 %v564
        %822 = vmatprep.subr.mxu0 0.0
        %823 = vmatpush1.msra.mxu0 %v565
        %824 = vmatprep.subr.mxu0 0.0
        %825 = vmatpush1.msra.mxu0 %v566
        %826 = vmatprep.subr.mxu0 0.0
        %827 = vmatpush1.msra.mxu0 %v567
        %828 = vmatprep.subr.mxu0 0.0
        %829 = vmatpush1.msra.mxu0 %v568
        %830 = vmatprep.subr.mxu0 0.0
        %831 = vmatpush1.msra.mxu0 0.0
        %832 = vmatprep.subr.mxu0 0.0
        %833 = vmatpush1.msra.mxu0 0.0
        %834 = vmatprep.subr.mxu0 0.0
        %835 = vmatpush1.msra.mxu0 0.0
        %836 = vmatprep.subr.mxu0 0.0
        %837 = vmatpush1.msra.mxu0 0.0
        %838 = vmatprep.subr.mxu0 0.0
        %839 = vmatpush1.msra.mxu0 0.0
        %840 = vmatprep.subr.mxu0 0.0
        %841 = vmatpush1.msra.mxu0 0.0
        %842 = vmatprep.subr.mxu0 0.0
        %843 = vmatpush1.msra.mxu0 0.0
        %844 = vmatprep.subr.mxu0 0.0
        %845 = vmatpush1.msra.mxu0 0.0
        %846 = vmatprep.subr.mxu0 0.0
        %847 = vmatpush1.msra.mxu0 0.0
        %848 = vmatprep.subr.mxu0 0.0
        %849 = vmatpush1.msra.mxu0 0.0
        %850 = vmatprep.subr.mxu0 0.0
        %851 = vmatpush1.msra.mxu0 0.0
        %852 = vmatprep.subr.mxu0 0.0
        %853 = vmatpush1.msra.mxu0 0.0
        %854 = vmatprep.mubr.f32.mxu0 %v731
        %855 = vmatmul.mubr.f32.gmra.mrb[0].mxu0 %v569
        %v856 = vpop.f32.mrb[0].mxu0
        %v857 = vadd.f32 %v632, %v856
        %v858 = vpop.f32.mrb[0].mxu0
        %859 = vmatprep.mubr.f32.mxu0 %v734
        %860 = vmatmul.mubr.f32.gmra.mrb[0].mxu0 %v571
        %v861 = vpop.f32.mrb[0].mxu0
        %v862 = vadd.f32 %v637, %v861
        %v863 = vpop.f32.mrb[0].mxu0
        %864 = vmatprep.mubr.f32.mxu0 %v737
        %865 = vmatmul.mubr.f32.gmra.mrb[0].mxu0 %v573
        %v866 = vpop.f32.mrb[0].mxu0
        %v867 = vadd.f32 %v642, %v866
        %v868 = vpop.f32.mrb[0].mxu0
        %869 = vmatprep.mubr.f32.mxu0 %v740
        %870 = vmatmul.mubr.f32.gmra.mrb[0].mxu0 %v575
        %v871 = vpop.f32.mrb[0].mxu0
        %v872 = vadd.f32 %v647, %v871
        %v873 = vpop.f32.mrb[0].mxu0
        %874 = vmatprep.mubr.f32.mxu0 %v743
        %875 = vmatmul.mubr.f32.gmra.mrb[0].mxu0 %v577
        %v876 = vpop.f32.mrb[0].mxu0
        %v877 = vadd.f32 %v652, %v876
        %v878 = vpop.f32.mrb[0].mxu0
        %879 = vmatprep.mubr.f32.mxu0 %v746
        %880 = vmatmul.mubr.f32.gmra.mrb[0].mxu0 %v579
        %v881 = vpop.f32.mrb[0].mxu0
        %v882 = vadd.f32 %v657, %v881
        %v883 = vpop.f32.mrb[0].mxu0
        %884 = vmatprep.mubr.f32.mxu0 %v749
        %885 = vmatmul.mubr.f32.gmra.mrb[0].mxu0 %v581
        %v886 = vpop.f32.mrb[0].mxu0
        %v887 = vadd.f32 %v662, %v886
        %v888 = vpop.f32.mrb[0].mxu0
        %889 = vmatprep.mubr.f32.mxu0 %v752
        %890 = vmatmul.mubr.f32.gmra.mrb[0].mxu0 %v583
        %v891 = vpop.f32.mrb[0].mxu0
        %v892 = vadd.f32 %v667, %v891
        %v893 = vpop.f32.mrb[0].mxu0
        %894 = vmatprep.mubr.f32.mxu0 %v755
        %895 = vmatmul.mubr.f32.gmra.mrb[0].mxu0 %v585
        %v896 = vpop.f32.mrb[0].mxu0
        %v897 = vadd.f32 %v672, %v896
        %v898 = vpop.f32.mrb[0].mxu0
        %899 = vmatprep.mubr.f32.mxu0 %v758
        %900 = vmatmul.mubr.f32.gmra.mrb[0].mxu0 %v587
        %v901 = vpop.f32.mrb[0].mxu0
        %v902 = vadd.f32 %v677, %v901
        %v903 = vpop.f32.mrb[0].mxu0
        %904 = vmatprep.mubr.f32.mxu0 %v761
        %905 = vmatmul.mubr.f32.gmra.mrb[0].mxu0 %v589
        %v906 = vpop.f32.mrb[0].mxu0
        %v907 = vadd.f32 %v682, %v906
        %v908 = vpop.f32.mrb[0].mxu0
        %909 = vmatprep.mubr.f32.mxu0 %v764
        %910 = vmatmul.mubr.f32.gmra.mrb[0].mxu0 %v591
        %v911 = vpop.f32.mrb[0].mxu0
        %v912 = vadd.f32 %v687, %v911
        %v913 = vpop.f32.mrb[0].mxu0
        %914 = vmatprep.mubr.f32.mxu0 %v767
        %915 = vmatmul.mubr.f32.gmra.mrb[0].mxu0 %v593
        %v916 = vpop.f32.mrb[0].mxu0
        %v917 = vadd.f32 %v692, %v916
        %v918 = vpop.f32.mrb[0].mxu0
        %919 = vmatprep.mubr.f32.mxu0 %v770
        %920 = vmatmul.mubr.f32.gmra.mrb[0].mxu0 %v595
        %v921 = vpop.f32.mrb[0].mxu0
        %v922 = vadd.f32 %v697, %v921
        %v923 = vpop.f32.mrb[0].mxu0
        %924 = vmatprep.mubr.f32.mxu0 %v773
        %925 = vmatmul.mubr.f32.gmra.mrb[0].mxu0 %v597
        %v926 = vpop.f32.mrb[0].mxu0
        %v927 = vadd.f32 %v702, %v926
        %v928 = vpop.f32.mrb[0].mxu0
        %929 = vmatprep.mubr.f32.mxu0 %v776
        %930 = vmatmul.mubr.f32.gmra.mrb[0].mxu0 %v599
        %v931 = vpop.f32.mrb[0].mxu0
        %v932 = vadd.f32 %v707, %v931
        %v933 = vpop.f32.mrb[0].mxu0
        %934 = vmatprep.mubr.f32.mxu0 %v779
        %935 = vmatmul.mubr.f32.gmra.mrb[0].mxu0 %v601
        %v936 = vpop.f32.mrb[0].mxu0
        %v937 = vadd.f32 %v712, %v936
        %v938 = vpop.f32.mrb[0].mxu0
        %939 = vmatprep.mubr.f32.mxu0 %v782
        %940 = vmatmul.mubr.f32.gmra.mrb[0].mxu0 %v603
        %v941 = vpop.f32.mrb[0].mxu0
        %v942 = vadd.f32 %v717, %v941
        %v943 = vpop.f32.mrb[0].mxu0
        %944 = vmatprep.mubr.f32.mxu0 %v785
        %945 = vmatmul.mubr.f32.gmra.mrb[0].mxu0 %v605
        %v946 = vpop.f32.mrb[0].mxu0
        %v947 = vadd.f32 %v722, %v946
        %v948 = vpop.f32.mrb[0].mxu0
        %949 = vmatprep.mubr.f32.mxu0 %v788
        %950 = vmatmul.mubr.f32.gmra.mrb[0].mxu0 %v607
        %v951 = vpop.f32.mrb[0].mxu0
        %v952 = vadd.f32 %v727, %v951
        %v953 = vpop.f32.mrb[0].mxu0
        %954 = vdwg.mxu0
        %v955 = vld [vmem:[%s3] sm:$0xff]
        %v956 = vld [vmem:[%s3 + $0x8] sm:$0xff]
        %vm957 = vcmask 130048
        %v959 = vsel %vm957, 0.0, 0
        %v962 = vsel %vm957, %v857, 0
        %v965 = vsel %vm957, %v862, 0
        %v968 = vsel %vm957, %v867, 0
        %v971 = vsel %vm957, %v872, 0
        %v974 = vsel %vm957, %v877, 0
        %v977 = vsel %vm957, %v882, 0
        %v980 = vsel %vm957, %v887, 0
        %v983 = vsel %vm957, %v892, 0
        %v986 = vsel %vm957, %v897, 0
        %v989 = vsel %vm957, %v902, 0
        %v992 = vsel %vm957, %v907, 0
        %v995 = vsel %vm957, %v912, 0
        %v998 = vsel %vm957, %v917, 0
        %v1001 = vsel %vm957, %v922, 0
        %v1004 = vsel %vm957, %v927, 0
        %v1007 = vsel %vm957, %v932, 0
        %v1010 = vsel %vm957, %v937, 0
        %v1013 = vsel %vm957, %v942, 0
        %v1016 = vsel %vm957, %v947, 0
        %v1019 = vsel %vm957, %v952, 0
        %1021 = vmatprep.subr.mxu0 0.0
        %1022 = vmatpush1.msra.mxu0 %v955
        %1023 = vmatprep.subr.mxu0 0.0
        %1024 = vmatpush1.msra.mxu0 %v956
        %1025 = vmatprep.subr.mxu0 0.0
        %1026 = vmatpush1.msra.mxu0 0.0
        %1027 = vmatprep.subr.mxu0 0.0
        %1028 = vmatpush1.msra.mxu0 0.0
        %1029 = vmatprep.subr.mxu0 0.0
        %1030 = vmatpush1.msra.mxu0 0.0
        %1031 = vmatprep.subr.mxu0 0.0
        %1032 = vmatpush1.msra.mxu0 0.0
        %1033 = vmatprep.subr.mxu0 0.0
        %1034 = vmatpush1.msra.mxu0 0.0
        %1035 = vmatprep.subr.mxu0 0.0
        %1036 = vmatpush1.msra.mxu0 0.0
        %1037 = vmatprep.subr.mxu0 0.0
        %1038 = vmatpush1.msra.mxu0 0.0
        %1039 = vmatprep.subr.mxu0 0.0
        %1040 = vmatpush1.msra.mxu0 0.0
        %1041 = vmatprep.subr.mxu0 0.0
        %1042 = vmatpush1.msra.mxu0 0.0
        %1043 = vmatprep.subr.mxu0 0.0
        %1044 = vmatpush1.msra.mxu0 0.0
        %1045 = vmatprep.subr.mxu0 0.0
        %1046 = vmatpush1.msra.mxu0 0.0
        %1047 = vmatprep.subr.mxu0 0.0
        %1048 = vmatpush1.msra.mxu0 0.0
        %1049 = vmatprep.subr.mxu0 0.0
        %1050 = vmatpush1.msra.mxu0 0.0
        %1051 = vmatprep.subr.mxu0 0.0
        %1052 = vmatpush1.msra.mxu0 0.0
        %1053 = vmatprep.subr.mxu0 0.0
        %1054 = vmatpush1.msra.mxu0 0.0
        %1055 = vmatprep.subr.mxu0 0.0
        %1056 = vmatpush1.msra.mxu0 0.0
        %1057 = vmatprep.subr.mxu0 0.0
        %1058 = vmatpush1.msra.mxu0 0.0
        %1059 = vmatprep.subr.mxu0 0.0
        %1060 = vmatpush1.msra.mxu0 0.0
        %1061 = vmatprep.subr.mxu0 0.0
        %1062 = vmatpush1.msra.mxu0 0.0
        %1063 = vmatprep.subr.mxu0 0.0
        %1064 = vmatpush1.msra.mxu0 0.0
        %1065 = vmatprep.subr.mxu0 0.0
        %1066 = vmatpush1.msra.mxu0 0.0
        %1067 = vmatprep.subr.mxu0 0.0
        %1068 = vmatpush1.msra.mxu0 0.0
        %1069 = vmatprep.subr.mxu0 0.0
        %1070 = vmatpush1.msra.mxu0 0.0
        %1071 = vmatprep.subr.mxu0 0.0
        %1072 = vmatpush1.msra.mxu0 0.0
        %1073 = vmatprep.subr.mxu0 0.0
        %1074 = vmatpush1.msra.mxu0 0.0
        %1075 = vmatprep.subr.mxu0 0.0
        %1076 = vmatpush1.msra.mxu0 0.0
        %1077 = vmatprep.subr.mxu0 0.0
        %1078 = vmatpush1.msra.mxu0 0.0
        %1079 = vmatprep.subr.mxu0 0.0
        %1080 = vmatpush1.msra.mxu0 0.0
        %1081 = vmatprep.subr.mxu0 0.0
        %1082 = vmatpush1.msra.mxu0 0.0
        %1083 = vmatprep.subr.mxu0 0.0
        %1084 = vmatpush1.msra.mxu0 0.0
        %1085 = vmatprep.mubr.f32.mxu0 0.0
        %1086 = vmatmul.mubr.f32.gmra.mrb[0].mxu0 %v959
        %v1087 = vpop.f32.mrb[0].mxu0
        %v1088 = vadd.f32 0.0, %v1087
        %v1089 = vpop.f32.mrb[0].mxu0
        %1090 = vmatprep.mubr.f32.mxu0 0.0
        %1091 = vmatmul.mubr.f32.gmra.mrb[0].mxu0 %v962
        %v1092 = vpop.f32.mrb[0].mxu0
        %v1093 = vadd.f32 0.0, %v1092
        %v1094 = vpop.f32.mrb[0].mxu0
        %1095 = vmatprep.mubr.f32.mxu0 0.0
        %1096 = vmatmul.mubr.f32.gmra.mrb[0].mxu0 %v965
        %v1097 = vpop.f32.mrb[0].mxu0
        %v1098 = vadd.f32 0.0, %v1097
        %v1099 = vpop.f32.mrb[0].mxu0
        %1100 = vmatprep.mubr.f32.mxu0 0.0
        %1101 = vmatmul.mubr.f32.gmra.mrb[0].mxu0 %v968
        %v1102 = vpop.f32.mrb[0].mxu0
        %v1103 = vadd.f32 0.0, %v1102
        %v1104 = vpop.f32.mrb[0].mxu0
        %1105 = vmatprep.mubr.f32.mxu0 0.0
        %1106 = vmatmul.mubr.f32.gmra.mrb[0].mxu0 %v971
        %v1107 = vpop.f32.mrb[0].mxu0
        %v1108 = vadd.f32 0.0, %v1107
        %v1109 = vpop.f32.mrb[0].mxu0
        %1110 = vmatprep.mubr.f32.mxu0 0.0
        %1111 = vmatmul.mubr.f32.gmra.mrb[0].mxu0 %v974
        %v1112 = vpop.f32.mrb[0].mxu0
        %v1113 = vadd.f32 0.0, %v1112
        %v1114 = vpop.f32.mrb[0].mxu0
        %1115 = vmatprep.mubr.f32.mxu0 0.0
        %1116 = vmatmul.mubr.f32.gmra.mrb[0].mxu0 %v977
        %v1117 = vpop.f32.mrb[0].mxu0
        %v1118 = vadd.f32 0.0, %v1117
        %v1119 = vpop.f32.mrb[0].mxu0
        %1120 = vmatprep.mubr.f32.mxu0 0.0
        %1121 = vmatmul.mubr.f32.gmra.mrb[0].mxu0 %v980
        %v1122 = vpop.f32.mrb[0].mxu0
        %v1123 = vadd.f32 0.0, %v1122
        %v1124 = vpop.f32.mrb[0].mxu0
        %1125 = vmatprep.mubr.f32.mxu0 0.0
        %1126 = vmatmul.mubr.f32.gmra.mrb[0].mxu0 %v983
        %v1127 = vpop.f32.mrb[0].mxu0
        %v1128 = vadd.f32 0.0, %v1127
        %v1129 = vpop.f32.mrb[0].mxu0
        %1130 = vmatprep.mubr.f32.mxu0 0.0
        %1131 = vmatmul.mubr.f32.gmra.mrb[0].mxu0 %v986
        %v1132 = vpop.f32.mrb[0].mxu0
        %v1133 = vadd.f32 0.0, %v1132
        %v1134 = vpop.f32.mrb[0].mxu0
        %1135 = vmatprep.mubr.f32.mxu0 0.0
        %1136 = vmatmul.mubr.f32.gmra.mrb[0].mxu0 %v989
        %v1137 = vpop.f32.mrb[0].mxu0
        %v1138 = vadd.f32 0.0, %v1137
        %v1139 = vpop.f32.mrb[0].mxu0
        %1140 = vmatprep.mubr.f32.mxu0 0.0
        %1141 = vmatmul.mubr.f32.gmra.mrb[0].mxu0 %v992
        %v1142 = vpop.f32.mrb[0].mxu0
        %v1143 = vadd.f32 0.0, %v1142
        %v1144 = vpop.f32.mrb[0].mxu0
        %1145 = vmatprep.mubr.f32.mxu0 0.0
        %1146 = vmatmul.mubr.f32.gmra.mrb[0].mxu0 %v995
        %v1147 = vpop.f32.mrb[0].mxu0
        %v1148 = vadd.f32 0.0, %v1147
        %v1149 = vpop.f32.mrb[0].mxu0
        %1150 = vmatprep.mubr.f32.mxu0 0.0
        %1151 = vmatmul.mubr.f32.gmra.mrb[0].mxu0 %v998
        %v1152 = vpop.f32.mrb[0].mxu0
        %v1153 = vadd.f32 0.0, %v1152
        %v1154 = vpop.f32.mrb[0].mxu0
        %1155 = vmatprep.mubr.f32.mxu0 0.0
        %1156 = vmatmul.mubr.f32.gmra.mrb[0].mxu0 %v1001
        %v1157 = vpop.f32.mrb[0].mxu0
        %v1158 = vadd.f32 0.0, %v1157
        %v1159 = vpop.f32.mrb[0].mxu0
        %1160 = vmatprep.mubr.f32.mxu0 0.0
        %1161 = vmatmul.mubr.f32.gmra.mrb[0].mxu0 %v1004
        %v1162 = vpop.f32.mrb[0].mxu0
        %v1163 = vadd.f32 0.0, %v1162
        %v1164 = vpop.f32.mrb[0].mxu0
        %1165 = vmatprep.mubr.f32.mxu0 0.0
        %1166 = vmatmul.mubr.f32.gmra.mrb[0].mxu0 %v1007
        %v1167 = vpop.f32.mrb[0].mxu0
        %v1168 = vadd.f32 0.0, %v1167
        %v1169 = vpop.f32.mrb[0].mxu0
        %1170 = vmatprep.mubr.f32.mxu0 0.0
        %1171 = vmatmul.mubr.f32.gmra.mrb[0].mxu0 %v1010
        %v1172 = vpop.f32.mrb[0].mxu0
        %v1173 = vadd.f32 0.0, %v1172
        %v1174 = vpop.f32.mrb[0].mxu0
        %1175 = vmatprep.mubr.f32.mxu0 0.0
        %1176 = vmatmul.mubr.f32.gmra.mrb[0].mxu0 %v1013
        %v1177 = vpop.f32.mrb[0].mxu0
        %v1178 = vadd.f32 0.0, %v1177
        %v1179 = vpop.f32.mrb[0].mxu0
        %1180 = vmatprep.mubr.f32.mxu0 0.0
        %1181 = vmatmul.mubr.f32.gmra.mrb[0].mxu0 %v1016
        %v1182 = vpop.f32.mrb[0].mxu0
        %v1183 = vadd.f32 0.0, %v1182
        %v1184 = vpop.f32.mrb[0].mxu0
        %1185 = vmatprep.mubr.f32.mxu0 0.0
        %1186 = vmatmul.mubr.f32.gmra.mrb[0].mxu0 %v1019
        %v1187 = vpop.f32.mrb[0].mxu0
        %v1188 = vadd.f32 0.0, %v1187
        %v1189 = vpop.f32.mrb[0].mxu0
        %1190 = vmatprep.mubr.f32.mxu0 0.0
        %1191 = vmatmul.mubr.f32.gmra.mrb[0].mxu0 %v959
        %v1192 = vpop.f32.mrb[0].mxu0
        %v1193 = vadd.f32 0.0, %v1192
        %v1194 = vpop.f32.mrb[0].mxu0
        %1195 = vdwg.mxu0
        %1216 = vrot.lane.b32.xlu0 %v1093, 112
        %v1217 = vpop.permute.xlu0 %1216
        %1218 = vrot.lane.b32.xlu0 %v1098, 112
        %v1219 = vpop.permute.xlu0 %1218
        %1220 = vrot.lane.b32.xlu0 %v1103, 112
        %v1221 = vpop.permute.xlu0 %1220
        %1222 = vrot.lane.b32.xlu0 %v1108, 112
        %v1223 = vpop.permute.xlu0 %1222
        %1224 = vrot.lane.b32.xlu0 %v1113, 112
        %v1225 = vpop.permute.xlu0 %1224
        %1226 = vrot.lane.b32.xlu0 %v1118, 112
        %v1227 = vpop.permute.xlu0 %1226
        %1228 = vrot.lane.b32.xlu0 %v1123, 112
        %v1229 = vpop.permute.xlu0 %1228
        %1230 = vrot.lane.b32.xlu0 %v1128, 112
        %v1231 = vpop.permute.xlu0 %1230
        %1232 = vrot.lane.b32.xlu0 %v1133, 112
        %v1233 = vpop.permute.xlu0 %1232
        %1234 = vrot.lane.b32.xlu0 %v1138, 112
        %v1235 = vpop.permute.xlu0 %1234
        %1236 = vrot.lane.b32.xlu0 %v1143, 112
        %v1237 = vpop.permute.xlu0 %1236
        %1238 = vrot.lane.b32.xlu0 %v1148, 112
        %v1239 = vpop.permute.xlu0 %1238
        %1240 = vrot.lane.b32.xlu0 %v1153, 112
        %v1241 = vpop.permute.xlu0 %1240
        %1242 = vrot.lane.b32.xlu0 %v1158, 112
        %v1243 = vpop.permute.xlu0 %1242
        %1244 = vrot.lane.b32.xlu0 %v1163, 112
        %v1245 = vpop.permute.xlu0 %1244
        %1246 = vrot.lane.b32.xlu0 %v1168, 112
        %v1247 = vpop.permute.xlu0 %1246
        %1248 = vrot.lane.b32.xlu0 %v1173, 112
        %v1249 = vpop.permute.xlu0 %1248
        %1250 = vrot.lane.b32.xlu0 %v1178, 112
        %v1251 = vpop.permute.xlu0 %1250
        %1252 = vrot.lane.b32.xlu0 %v1183, 112
        %v1253 = vpop.permute.xlu0 %1252
        %1254 = vrot.lane.b32.xlu0 %v1188, 112
        %v1255 = vpop.permute.xlu0 %1254
        %v1276 = vadd.f32 %v1088, %v1217
        %v1277 = vadd.f32 %v1093, %v1219
        %v1278 = vadd.f32 %v1098, %v1221
        %v1279 = vadd.f32 %v1103, %v1223
        %v1280 = vadd.f32 %v1108, %v1225
        %v1281 = vadd.f32 %v1113, %v1227
        %v1282 = vadd.f32 %v1118, %v1229
        %v1283 = vadd.f32 %v1123, %v1231
        %v1284 = vadd.f32 %v1128, %v1233
        %v1285 = vadd.f32 %v1133, %v1235
        %v1286 = vadd.f32 %v1138, %v1237
        %v1287 = vadd.f32 %v1143, %v1239
        %v1288 = vadd.f32 %v1148, %v1241
        %v1289 = vadd.f32 %v1153, %v1243
        %v1290 = vadd.f32 %v1158, %v1245
        %v1291 = vadd.f32 %v1163, %v1247
        %v1292 = vadd.f32 %v1168, %v1249
        %v1293 = vadd.f32 %v1173, %v1251
        %v1294 = vadd.f32 %v1178, %v1253
        %v1295 = vadd.f32 %v1183, %v1255
        %1297 = vrot.lane.b32.xlu0 %v1098, 96
        %v1298 = vpop.permute.xlu0 %1297
        %1299 = vrot.lane.b32.xlu0 %v1103, 96
        %v1300 = vpop.permute.xlu0 %1299
        %1301 = vrot.lane.b32.xlu0 %v1108, 96
        %v1302 = vpop.permute.xlu0 %1301
        %1303 = vrot.lane.b32.xlu0 %v1113, 96
        %v1304 = vpop.permute.xlu0 %1303
        %1305 = vrot.lane.b32.xlu0 %v1118, 96
        %v1306 = vpop.permute.xlu0 %1305
        %1307 = vrot.lane.b32.xlu0 %v1123, 96
        %v1308 = vpop.permute.xlu0 %1307
        %1309 = vrot.lane.b32.xlu0 %v1128, 96
        %v1310 = vpop.permute.xlu0 %1309
        %1311 = vrot.lane.b32.xlu0 %v1133, 96
        %v1312 = vpop.permute.xlu0 %1311
        %1313 = vrot.lane.b32.xlu0 %v1138, 96
        %v1314 = vpop.permute.xlu0 %1313
        %1315 = vrot.lane.b32.xlu0 %v1143, 96
        %v1316 = vpop.permute.xlu0 %1315
        %1317 = vrot.lane.b32.xlu0 %v1148, 96
        %v1318 = vpop.permute.xlu0 %1317
        %1319 = vrot.lane.b32.xlu0 %v1153, 96
        %v1320 = vpop.permute.xlu0 %1319
        %1321 = vrot.lane.b32.xlu0 %v1158, 96
        %v1322 = vpop.permute.xlu0 %1321
        %1323 = vrot.lane.b32.xlu0 %v1163, 96
        %v1324 = vpop.permute.xlu0 %1323
        %1325 = vrot.lane.b32.xlu0 %v1168, 96
        %v1326 = vpop.permute.xlu0 %1325
        %1327 = vrot.lane.b32.xlu0 %v1173, 96
        %v1328 = vpop.permute.xlu0 %1327
        %1329 = vrot.lane.b32.xlu0 %v1178, 96
        %v1330 = vpop.permute.xlu0 %1329
        %1331 = vrot.lane.b32.xlu0 %v1183, 96
        %v1332 = vpop.permute.xlu0 %1331
        %1333 = vrot.lane.b32.xlu0 %v1188, 96
        %v1334 = vpop.permute.xlu0 %1333
        %1335 = vrot.lane.b32.xlu0 %v1193, 96
        %v1336 = vpop.permute.xlu0 %1335
        %v1357 = vadd.f32 %v1276, %v1298
        %v1358 = vadd.f32 %v1277, %v1300
        %v1359 = vadd.f32 %v1278, %v1302
        %v1360 = vadd.f32 %v1279, %v1304
        %v1361 = vadd.f32 %v1280, %v1306
        %v1362 = vadd.f32 %v1281, %v1308
        %v1363 = vadd.f32 %v1282, %v1310
        %v1364 = vadd.f32 %v1283, %v1312
        %v1365 = vadd.f32 %v1284, %v1314
        %v1366 = vadd.f32 %v1285, %v1316
        %v1367 = vadd.f32 %v1286, %v1318
        %v1368 = vadd.f32 %v1287, %v1320
        %v1369 = vadd.f32 %v1288, %v1322
        %v1370 = vadd.f32 %v1289, %v1324
        %v1371 = vadd.f32 %v1290, %v1326
        %v1372 = vadd.f32 %v1291, %v1328
        %v1373 = vadd.f32 %v1292, %v1330
        %v1374 = vadd.f32 %v1293, %v1332
        %v1375 = vadd.f32 %v1294, %v1334
        %v1376 = vadd.f32 %v1295, %v1336
        %v1377 = vld [vmem:[%s4] sm:$0x1]
        %v1379 = vlaneseq
        %v1380 = vshrl.u32 %v1379, 7
        %v1381 = vsub.s32 0, %v1380
        %v1382 = vrot.slane %v1377, %v1381
        %v1384 = vadd.f32 %v1357, %v1382
        %v1385 = vadd.f32 %v1358, %v1382
        %v1386 = vadd.f32 %v1359, %v1382
        %v1387 = vadd.f32 %v1360, %v1382
        %v1388 = vadd.f32 %v1361, %v1382
        %v1389 = vadd.f32 %v1362, %v1382
        %v1390 = vadd.f32 %v1363, %v1382
        %v1391 = vadd.f32 %v1364, %v1382
        %v1392 = vadd.f32 %v1365, %v1382
        %v1393 = vadd.f32 %v1366, %v1382
        %v1394 = vadd.f32 %v1367, %v1382
        %v1395 = vadd.f32 %v1368, %v1382
        %v1396 = vadd.f32 %v1369, %v1382
        %v1397 = vadd.f32 %v1370, %v1382
        %v1398 = vadd.f32 %v1371, %v1382
        %v1399 = vadd.f32 %v1372, %v1382
        %v1400 = vadd.f32 %v1373, %v1382
        %v1401 = vadd.f32 %v1374, %v1382
        %v1402 = vadd.f32 %v1375, %v1382
        %v1403 = vadd.f32 %v1376, %v1382
        %v1404 = vld [vmem:[%s5] sm:$0x1]
        %v1406 = vlaneseq
        %v1407 = vshrl.u32 %v1406, 7
        %v1408 = vsub.s32 0, %v1407
        %v1409 = vrot.slane %v1404, %v1408
        %v1411 = vmul.f32 %v1384, %v1409
        %v1412 = vmul.f32 %v1385, %v1409
        %v1413 = vmul.f32 %v1386, %v1409
        %v1414 = vmul.f32 %v1387, %v1409
        %v1415 = vmul.f32 %v1388, %v1409
        %v1416 = vmul.f32 %v1389, %v1409
        %v1417 = vmul.f32 %v1390, %v1409
        %v1418 = vmul.f32 %v1391, %v1409
        %v1419 = vmul.f32 %v1392, %v1409
        %v1420 = vmul.f32 %v1393, %v1409
        %v1421 = vmul.f32 %v1394, %v1409
        %v1422 = vmul.f32 %v1395, %v1409
        %v1423 = vmul.f32 %v1396, %v1409
        %v1424 = vmul.f32 %v1397, %v1409
        %v1425 = vmul.f32 %v1398, %v1409
        %v1426 = vmul.f32 %v1399, %v1409
        %v1427 = vmul.f32 %v1400, %v1409
        %v1428 = vmul.f32 %v1401, %v1409
        %v1429 = vmul.f32 %v1402, %v1409
        %v1430 = vmul.f32 %v1403, %v1409
        %v1431 = vld [vmem:[%s6] sm:$0x1]
        %v1433 = vlaneseq
        %v1434 = vshrl.u32 %v1433, 7
        %v1435 = vsub.s32 0, %v1434
        %v1436 = vrot.slane %v1431, %v1435
        %v1438 = vadd.f32 %v1411, %v1436
        %v1439 = vadd.f32 %v1412, %v1436
        %v1440 = vadd.f32 %v1413, %v1436
        %v1441 = vadd.f32 %v1414, %v1436
        %v1442 = vadd.f32 %v1415, %v1436
        %v1443 = vadd.f32 %v1416, %v1436
        %v1444 = vadd.f32 %v1417, %v1436
        %v1445 = vadd.f32 %v1418, %v1436
        %v1446 = vadd.f32 %v1419, %v1436
        %v1447 = vadd.f32 %v1420, %v1436
        %v1448 = vadd.f32 %v1421, %v1436
        %v1449 = vadd.f32 %v1422, %v1436
        %v1450 = vadd.f32 %v1423, %v1436
        %v1451 = vadd.f32 %v1424, %v1436
        %v1452 = vadd.f32 %v1425, %v1436
        %v1453 = vadd.f32 %v1426, %v1436
        %v1454 = vadd.f32 %v1427, %v1436
        %v1455 = vadd.f32 %v1428, %v1436
        %v1456 = vadd.f32 %v1429, %v1436
        %v1457 = vadd.f32 %v1430, %v1436
        %v1458 = vmax.f32 %v1438, 0.0
        %v1459 = vmax.f32 %v1439, 0.0
        %v1460 = vmax.f32 %v1440, 0.0
        %v1461 = vmax.f32 %v1441, 0.0
        %v1462 = vmax.f32 %v1442, 0.0
        %v1463 = vmax.f32 %v1443, 0.0
        %v1464 = vmax.f32 %v1444, 0.0
        %v1465 = vmax.f32 %v1445, 0.0
        %v1466 = vmax.f32 %v1446, 0.0
        %v1467 = vmax.f32 %v1447, 0.0
        %v1468 = vmax.f32 %v1448, 0.0
        %v1469 = vmax.f32 %v1449, 0.0
        %v1470 = vmax.f32 %v1450, 0.0
        %v1471 = vmax.f32 %v1451, 0.0
        %v1472 = vmax.f32 %v1452, 0.0
        %v1473 = vmax.f32 %v1453, 0.0
        %v1474 = vmax.f32 %v1454, 0.0
        %v1475 = vmax.f32 %v1455, 0.0
        %v1476 = vmax.f32 %v1456, 0.0
        %v1477 = vmax.f32 %v1457, 0.0
        %v1478 = vmax.f32 %v1458, -3e+38
        %v1479 = vmax.f32 %v1459, %v1460
        %v1480 = vmax.f32 %v1461, %v1462
        %v1481 = vmax.f32 %v1463, %v1464
        %v1482 = vmax.f32 %v1465, %v1466
        %v1483 = vmax.f32 %v1467, %v1468
        %v1484 = vmax.f32 %v1469, %v1470
        %v1485 = vmax.f32 %v1471, %v1472
        %v1486 = vmax.f32 %v1473, %v1474
        %v1487 = vmax.f32 %v1475, %v1476
        %v1488 = vmax.f32 %v1477, -3e+38
        %v1489 = vld [vmem:[%s7] sm:$0xff]
        %v1490 = vld [vmem:[%s7 + $0x8] sm:$0xff]
        %v1492 = vsel %vm957, %v1478, 0
        %v1495 = vsel %vm957, %v1479, 0
        %v1498 = vsel %vm957, %v1480, 0
        %v1501 = vsel %vm957, %v1481, 0
        %v1504 = vsel %vm957, %v1482, 0
        %v1507 = vsel %vm957, %v1483, 0
        %v1510 = vsel %vm957, %v1484, 0
        %v1513 = vsel %vm957, %v1485, 0
        %v1516 = vsel %vm957, %v1486, 0
        %v1519 = vsel %vm957, %v1487, 0
        %v1522 = vsel %vm957, %v1488, 0
        %1524 = vmatprep.subr.mxu0 0.0
        %1525 = vmatpush1.msra.mxu0 %v1489
        %1526 = vmatprep.subr.mxu0 0.0
        %1527 = vmatpush1.msra.mxu0 %v1490
        %1528 = vmatprep.subr.mxu0 0.0
        %1529 = vmatpush1.msra.mxu0 0.0
        %1530 = vmatprep.subr.mxu0 0.0
        %1531 = vmatpush1.msra.mxu0 0.0
        %1532 = vmatprep.subr.mxu0 0.0
        %1533 = vmatpush1.msra.mxu0 0.0
        %1534 = vmatprep.subr.mxu0 0.0
        %1535 = vmatpush1.msra.mxu0 0.0
        %1536 = vmatprep.subr.mxu0 0.0
        %1537 = vmatpush1.msra.mxu0 0.0
        %1538 = vmatprep.subr.mxu0 0.0
        %1539 = vmatpush1.msra.mxu0 0.0
        %1540 = vmatprep.subr.mxu0 0.0
        %1541 = vmatpush1.msra.mxu0 0.0
        %1542 = vmatprep.subr.mxu0 0.0
        %1543 = vmatpush1.msra.mxu0 0.0
        %1544 = vmatprep.subr.mxu0 0.0
        %1545 = vmatpush1.msra.mxu0 0.0
        %1546 = vmatprep.subr.mxu0 0.0
        %1547 = vmatpush1.msra.mxu0 0.0
        %1548 = vmatprep.subr.mxu0 0.0
        %1549 = vmatpush1.msra.mxu0 0.0
        %1550 = vmatprep.subr.mxu0 0.0
        %1551 = vmatpush1.msra.mxu0 0.0
        %1552 = vmatprep.subr.mxu0 0.0
        %1553 = vmatpush1.msra.mxu0 0.0
        %1554 = vmatprep.subr.mxu0 0.0
        %1555 = vmatpush1.msra.mxu0 0.0
        %1556 = vmatprep.subr.mxu0 0.0
        %1557 = vmatpush1.msra.mxu0 0.0
        %1558 = vmatprep.subr.mxu0 0.0
        %1559 = vmatpush1.msra.mxu0 0.0
        %1560 = vmatprep.subr.mxu0 0.0
        %1561 = vmatpush1.msra.mxu0 0.0
        %1562 = vmatprep.subr.mxu0 0.0
        %1563 = vmatpush1.msra.mxu0 0.0
        %1564 = vmatprep.subr.mxu0 0.0
        %1565 = vmatpush1.msra.mxu0 0.0
        %1566 = vmatprep.subr.mxu0 0.0
        %1567 = vmatpush1.msra.mxu0 0.0
        %1568 = vmatprep.subr.mxu0 0.0
        %1569 = vmatpush1.msra.mxu0 0.0
        %1570 = vmatprep.subr.mxu0 0.0
        %1571 = vmatpush1.msra.mxu0 0.0
        %1572 = vmatprep.subr.mxu0 0.0
        %1573 = vmatpush1.msra.mxu0 0.0
        %1574 = vmatprep.subr.mxu0 0.0
        %1575 = vmatpush1.msra.mxu0 0.0
        %1576 = vmatprep.subr.mxu0 0.0
        %1577 = vmatpush1.msra.mxu0 0.0
        %1578 = vmatprep.subr.mxu0 0.0
        %1579 = vmatpush1.msra.mxu0 0.0
        %1580 = vmatprep.subr.mxu0 0.0
        %1581 = vmatpush1.msra.mxu0 0.0
        %1582 = vmatprep.subr.mxu0 0.0
        %1583 = vmatpush1.msra.mxu0 0.0
        %1584 = vmatprep.subr.mxu0 0.0
        %1585 = vmatpush1.msra.mxu0 0.0
        %1586 = vmatprep.subr.mxu0 0.0
        %1587 = vmatpush1.msra.mxu0 0.0
        %1588 = vmatprep.mubr.f32.mxu0 0.0
        %1589 = vmatmul.mubr.f32.gmra.mrb[0].mxu0 %v959
        %v1590 = vpop.f32.mrb[0].mxu0
        %v1591 = vadd.f32 0.0, %v1590
        %v1592 = vpop.f32.mrb[0].mxu0
        %1593 = vmatprep.mubr.f32.mxu0 0.0
        %1594 = vmatmul.mubr.f32.gmra.mrb[0].mxu0 %v1492
        %v1595 = vpop.f32.mrb[0].mxu0
        %v1596 = vadd.f32 0.0, %v1595
        %v1597 = vpop.f32.mrb[0].mxu0
        %1598 = vmatprep.mubr.f32.mxu0 0.0
        %1599 = vmatmul.mubr.f32.gmra.mrb[0].mxu0 %v1495
        %v1600 = vpop.f32.mrb[0].mxu0
        %v1601 = vadd.f32 0.0, %v1600
        %v1602 = vpop.f32.mrb[0].mxu0
        %1603 = vmatprep.mubr.f32.mxu0 0.0
        %1604 = vmatmul.mubr.f32.gmra.mrb[0].mxu0 %v1498
        %v1605 = vpop.f32.mrb[0].mxu0
        %v1606 = vadd.f32 0.0, %v1605
        %v1607 = vpop.f32.mrb[0].mxu0
        %1608 = vmatprep.mubr.f32.mxu0 0.0
        %1609 = vmatmul.mubr.f32.gmra.mrb[0].mxu0 %v1501
        %v1610 = vpop.f32.mrb[0].mxu0
        %v1611 = vadd.f32 0.0, %v1610
        %v1612 = vpop.f32.mrb[0].mxu0
        %1613 = vmatprep.mubr.f32.mxu0 0.0
        %1614 = vmatmul.mubr.f32.gmra.mrb[0].mxu0 %v1504
        %v1615 = vpop.f32.mrb[0].mxu0
        %v1616 = vadd.f32 0.0, %v1615
        %v1617 = vpop.f32.mrb[0].mxu0
        %1618 = vmatprep.mubr.f32.mxu0 0.0
        %1619 = vmatmul.mubr.f32.gmra.mrb[0].mxu0 %v1507
        %v1620 = vpop.f32.mrb[0].mxu0
        %v1621 = vadd.f32 0.0, %v1620
        %v1622 = vpop.f32.mrb[0].mxu0
        %1623 = vmatprep.mubr.f32.mxu0 0.0
        %1624 = vmatmul.mubr.f32.gmra.mrb[0].mxu0 %v1510
        %v1625 = vpop.f32.mrb[0].mxu0
        %v1626 = vadd.f32 0.0, %v1625
        %v1627 = vpop.f32.mrb[0].mxu0
        %1628 = vmatprep.mubr.f32.mxu0 0.0
        %1629 = vmatmul.mubr.f32.gmra.mrb[0].mxu0 %v1513
        %v1630 = vpop.f32.mrb[0].mxu0
        %v1631 = vadd.f32 0.0, %v1630
        %v1632 = vpop.f32.mrb[0].mxu0
        %1633 = vmatprep.mubr.f32.mxu0 0.0
        %1634 = vmatmul.mubr.f32.gmra.mrb[0].mxu0 %v1516
        %v1635 = vpop.f32.mrb[0].mxu0
        %v1636 = vadd.f32 0.0, %v1635
        %v1637 = vpop.f32.mrb[0].mxu0
        %1638 = vmatprep.mubr.f32.mxu0 0.0
        %1639 = vmatmul.mubr.f32.gmra.mrb[0].mxu0 %v1519
        %v1640 = vpop.f32.mrb[0].mxu0
        %v1641 = vadd.f32 0.0, %v1640
        %v1642 = vpop.f32.mrb[0].mxu0
        %1643 = vmatprep.mubr.f32.mxu0 0.0
        %1644 = vmatmul.mubr.f32.gmra.mrb[0].mxu0 %v1522
        %v1645 = vpop.f32.mrb[0].mxu0
        %v1646 = vadd.f32 0.0, %v1645
        %v1647 = vpop.f32.mrb[0].mxu0
        %1648 = vmatprep.mubr.f32.mxu0 0.0
        %1649 = vmatmul.mubr.f32.gmra.mrb[0].mxu0 %v959
        %v1650 = vpop.f32.mrb[0].mxu0
        %v1651 = vadd.f32 0.0, %v1650
        %v1652 = vpop.f32.mrb[0].mxu0
        %1653 = vdwg.mxu0
        %1665 = vrot.lane.b32.xlu0 %v1596, 120
        %v1666 = vpop.permute.xlu0 %1665
        %1667 = vrot.lane.b32.xlu0 %v1601, 120
        %v1668 = vpop.permute.xlu0 %1667
        %1669 = vrot.lane.b32.xlu0 %v1606, 120
        %v1670 = vpop.permute.xlu0 %1669
        %1671 = vrot.lane.b32.xlu0 %v1611, 120
        %v1672 = vpop.permute.xlu0 %1671
        %1673 = vrot.lane.b32.xlu0 %v1616, 120
        %v1674 = vpop.permute.xlu0 %1673
        %1675 = vrot.lane.b32.xlu0 %v1621, 120
        %v1676 = vpop.permute.xlu0 %1675
        %1677 = vrot.lane.b32.xlu0 %v1626, 120
        %v1678 = vpop.permute.xlu0 %1677
        %1679 = vrot.lane.b32.xlu0 %v1631, 120
        %v1680 = vpop.permute.xlu0 %1679
        %1681 = vrot.lane.b32.xlu0 %v1636, 120
        %v1682 = vpop.permute.xlu0 %1681
        %1683 = vrot.lane.b32.xlu0 %v1641, 120
        %v1684 = vpop.permute.xlu0 %1683
        %1685 = vrot.lane.b32.xlu0 %v1646, 120
        %v1686 = vpop.permute.xlu0 %1685
        %v1698 = vadd.f32 %v1591, %v1666
        %v1699 = vadd.f32 %v1596, %v1668
        %v1700 = vadd.f32 %v1601, %v1670
        %v1701 = vadd.f32 %v1606, %v1672
        %v1702 = vadd.f32 %v1611, %v1674
        %v1703 = vadd.f32 %v1616, %v1676
        %v1704 = vadd.f32 %v1621, %v1678
        %v1705 = vadd.f32 %v1626, %v1680
        %v1706 = vadd.f32 %v1631, %v1682
        %v1707 = vadd.f32 %v1636, %v1684
        %v1708 = vadd.f32 %v1641, %v1686
        %1710 = vrot.lane.b32.xlu0 %v1601, 112
        %v1711 = vpop.permute.xlu0 %1710
        %1712 = vrot.lane.b32.xlu0 %v1606, 112
        %v1713 = vpop.permute.xlu0 %1712
        %1714 = vrot.lane.b32.xlu0 %v1611, 112
        %v1715 = vpop.permute.xlu0 %1714
        %1716 = vrot.lane.b32.xlu0 %v1616, 112
        %v1717 = vpop.permute.xlu0 %1716
        %1718 = vrot.lane.b32.xlu0 %v1621, 112
        %v1719 = vpop.permute.xlu0 %1718
        %1720 = vrot.lane.b32.xlu0 %v1626, 112
        %v1721 = vpop.permute.xlu0 %1720
        %1722 = vrot.lane.b32.xlu0 %v1631, 112
        %v1723 = vpop.permute.xlu0 %1722
        %1724 = vrot.lane.b32.xlu0 %v1636, 112
        %v1725 = vpop.permute.xlu0 %1724
        %1726 = vrot.lane.b32.xlu0 %v1641, 112
        %v1727 = vpop.permute.xlu0 %1726
        %1728 = vrot.lane.b32.xlu0 %v1646, 112
        %v1729 = vpop.permute.xlu0 %1728
        %1730 = vrot.lane.b32.xlu0 %v1651, 112
        %v1731 = vpop.permute.xlu0 %1730
        %v1743 = vadd.f32 %v1698, %v1711
        %v1744 = vadd.f32 %v1699, %v1713
        %v1745 = vadd.f32 %v1700, %v1715
        %v1746 = vadd.f32 %v1701, %v1717
        %v1747 = vadd.f32 %v1702, %v1719
        %v1748 = vadd.f32 %v1703, %v1721
        %v1749 = vadd.f32 %v1704, %v1723
        %v1750 = vadd.f32 %v1705, %v1725
        %v1751 = vadd.f32 %v1706, %v1727
        %v1752 = vadd.f32 %v1707, %v1729
        %v1753 = vadd.f32 %v1708, %v1731
        %v1754 = vld [vmem:[%s8] sm:$0x1]
        %v1756 = vlaneseq
        %v1757 = vshrl.u32 %v1756, 7
        %v1758 = vsub.s32 0, %v1757
        %v1759 = vrot.slane %v1754, %v1758
        %v1761 = vadd.f32 %v1743, %v1759
        %v1762 = vadd.f32 %v1744, %v1759
        %v1763 = vadd.f32 %v1745, %v1759
        %v1764 = vadd.f32 %v1746, %v1759
        %v1765 = vadd.f32 %v1747, %v1759
        %v1766 = vadd.f32 %v1748, %v1759
        %v1767 = vadd.f32 %v1749, %v1759
        %v1768 = vadd.f32 %v1750, %v1759
        %v1769 = vadd.f32 %v1751, %v1759
        %v1770 = vadd.f32 %v1752, %v1759
        %v1771 = vadd.f32 %v1753, %v1759
        %v1772 = vld [vmem:[%s9] sm:$0x1]
        %v1774 = vlaneseq
        %v1775 = vshrl.u32 %v1774, 7
        %v1776 = vsub.s32 0, %v1775
        %v1777 = vrot.slane %v1772, %v1776
        %v1779 = vmul.f32 %v1761, %v1777
        %v1780 = vmul.f32 %v1762, %v1777
        %v1781 = vmul.f32 %v1763, %v1777
        %v1782 = vmul.f32 %v1764, %v1777
        %v1783 = vmul.f32 %v1765, %v1777
        %v1784 = vmul.f32 %v1766, %v1777
        %v1785 = vmul.f32 %v1767, %v1777
        %v1786 = vmul.f32 %v1768, %v1777
        %v1787 = vmul.f32 %v1769, %v1777
        %v1788 = vmul.f32 %v1770, %v1777
        %v1789 = vmul.f32 %v1771, %v1777
        %v1790 = vld [vmem:[%s10] sm:$0x1]
        %v1792 = vlaneseq
        %v1793 = vshrl.u32 %v1792, 7
        %v1794 = vsub.s32 0, %v1793
        %v1795 = vrot.slane %v1790, %v1794
        %v1797 = vadd.f32 %v1779, %v1795
        %v1798 = vadd.f32 %v1780, %v1795
        %v1799 = vadd.f32 %v1781, %v1795
        %v1800 = vadd.f32 %v1782, %v1795
        %v1801 = vadd.f32 %v1783, %v1795
        %v1802 = vadd.f32 %v1784, %v1795
        %v1803 = vadd.f32 %v1785, %v1795
        %v1804 = vadd.f32 %v1786, %v1795
        %v1805 = vadd.f32 %v1787, %v1795
        %v1806 = vadd.f32 %v1788, %v1795
        %v1807 = vadd.f32 %v1789, %v1795
        %v1808 = vmax.f32 %v1797, 0.0
        %v1809 = vmax.f32 %v1798, 0.0
        %v1810 = vmax.f32 %v1799, 0.0
        %v1811 = vmax.f32 %v1800, 0.0
        %v1812 = vmax.f32 %v1801, 0.0
        %v1813 = vmax.f32 %v1802, 0.0
        %v1814 = vmax.f32 %v1803, 0.0
        %v1815 = vmax.f32 %v1804, 0.0
        %v1816 = vmax.f32 %v1805, 0.0
        %v1817 = vmax.f32 %v1806, 0.0
        %v1818 = vmax.f32 %v1807, 0.0
        %v1819 = vmax.f32 %v1808, -3e+38
        %v1820 = vmax.f32 %v1809, %v1810
        %v1821 = vmax.f32 %v1811, %v1812
        %v1822 = vmax.f32 %v1813, %v1814
        %v1823 = vmax.f32 %v1815, %v1816
        %v1824 = vmax.f32 %v1817, %v1818
        %v1825 = vld [vmem:[%s11] sm:$0xff]
        %vm1826 = vcmask 64512
        %v1828 = vsel %vm1826, %v1819, 0
        %v1831 = vsel %vm1826, %v1820, 0
        %v1834 = vsel %vm1826, %v1821, 0
        %v1837 = vsel %vm1826, %v1822, 0
        %v1840 = vsel %vm1826, %v1823, 0
        %v1843 = vsel %vm1826, %v1824, 0
        %1845 = vmatprep.subr.mxu0 0.0
        %1846 = vmatpush1.msra.mxu0 %v1825
        %1847 = vmatprep.subr.mxu0 0.0
        %1848 = vmatpush1.msra.mxu0 0.0
        %1849 = vmatprep.subr.mxu0 0.0
        %1850 = vmatpush1.msra.mxu0 0.0
        %1851 = vmatprep.subr.mxu0 0.0
        %1852 = vmatpush1.msra.mxu0 0.0
        %1853 = vmatprep.subr.mxu0 0.0
        %1854 = vmatpush1.msra.mxu0 0.0
        %1855 = vmatprep.subr.mxu0 0.0
        %1856 = vmatpush1.msra.mxu0 0.0
        %1857 = vmatprep.subr.mxu0 0.0
        %1858 = vmatpush1.msra.mxu0 0.0
        %1859 = vmatprep.subr.mxu0 0.0
        %1860 = vmatpush1.msra.mxu0 0.0
        %1861 = vmatprep.subr.mxu0 0.0
        %1862 = vmatpush1.msra.mxu0 0.0
        %1863 = vmatprep.subr.mxu0 0.0
        %1864 = vmatpush1.msra.mxu0 0.0
        %1865 = vmatprep.subr.mxu0 0.0
        %1866 = vmatpush1.msra.mxu0 0.0
        %1867 = vmatprep.subr.mxu0 0.0
        %1868 = vmatpush1.msra.mxu0 0.0
        %1869 = vmatprep.subr.mxu0 0.0
        %1870 = vmatpush1.msra.mxu0 0.0
        %1871 = vmatprep.subr.mxu0 0.0
        %1872 = vmatpush1.msra.mxu0 0.0
        %1873 = vmatprep.subr.mxu0 0.0
        %1874 = vmatpush1.msra.mxu0 0.0
        %1875 = vmatprep.subr.mxu0 0.0
        %1876 = vmatpush1.msra.mxu0 0.0
        %1877 = vmatprep.subr.mxu0 0.0
        %1878 = vmatpush1.msra.mxu0 0.0
        %1879 = vmatprep.subr.mxu0 0.0
        %1880 = vmatpush1.msra.mxu0 0.0
        %1881 = vmatprep.subr.mxu0 0.0
        %1882 = vmatpush1.msra.mxu0 0.0
        %1883 = vmatprep.subr.mxu0 0.0
        %1884 = vmatpush1.msra.mxu0 0.0
        %1885 = vmatprep.subr.mxu0 0.0
        %1886 = vmatpush1.msra.mxu0 0.0
        %1887 = vmatprep.subr.mxu0 0.0
        %1888 = vmatpush1.msra.mxu0 0.0
        %1889 = vmatprep.subr.mxu0 0.0
        %1890 = vmatpush1.msra.mxu0 0.0
        %1891 = vmatprep.subr.mxu0 0.0
        %1892 = vmatpush1.msra.mxu0 0.0
        %1893 = vmatprep.subr.mxu0 0.0
        %1894 = vmatpush1.msra.mxu0 0.0
        %1895 = vmatprep.subr.mxu0 0.0
        %1896 = vmatpush1.msra.mxu0 0.0
        %1897 = vmatprep.subr.mxu0 0.0
        %1898 = vmatpush1.msra.mxu0 0.0
        %1899 = vmatprep.subr.mxu0 0.0
        %1900 = vmatpush1.msra.mxu0 0.0
        %1901 = vmatprep.subr.mxu0 0.0
        %1902 = vmatpush1.msra.mxu0 0.0
        %1903 = vmatprep.subr.mxu0 0.0
        %1904 = vmatpush1.msra.mxu0 0.0
        %1905 = vmatprep.subr.mxu0 0.0
        %1906 = vmatpush1.msra.mxu0 0.0
        %1907 = vmatprep.subr.mxu0 0.0
        %1908 = vmatpush1.msra.mxu0 0.0
        %1909 = vmatprep.mubr.f32.mxu0 0.0
        %1910 = vmatmul.mubr.f32.gmra.mrb[0].mxu0 %v1828
        %v1911 = vpop.f32.mrb[0].mxu0
        %v1912 = vadd.f32 0.0, %v1911
        %v1913 = vpop.f32.mrb[0].mxu0
        %1914 = vmatprep.mubr.f32.mxu0 0.0
        %1915 = vmatmul.mubr.f32.gmra.mrb[0].mxu0 %v1831
        %v1916 = vpop.f32.mrb[0].mxu0
        %v1917 = vadd.f32 0.0, %v1916
        %v1918 = vpop.f32.mrb[0].mxu0
        %1919 = vmatprep.mubr.f32.mxu0 0.0
        %1920 = vmatmul.mubr.f32.gmra.mrb[0].mxu0 %v1834
        %v1921 = vpop.f32.mrb[0].mxu0
        %v1922 = vadd.f32 0.0, %v1921
        %v1923 = vpop.f32.mrb[0].mxu0
        %1924 = vmatprep.mubr.f32.mxu0 0.0
        %1925 = vmatmul.mubr.f32.gmra.mrb[0].mxu0 %v1837
        %v1926 = vpop.f32.mrb[0].mxu0
        %v1927 = vadd.f32 0.0, %v1926
        %v1928 = vpop.f32.mrb[0].mxu0
        %1929 = vmatprep.mubr.f32.mxu0 0.0
        %1930 = vmatmul.mubr.f32.gmra.mrb[0].mxu0 %v1840
        %v1931 = vpop.f32.mrb[0].mxu0
        %v1932 = vadd.f32 0.0, %v1931
        %v1933 = vpop.f32.mrb[0].mxu0
        %1934 = vmatprep.mubr.f32.mxu0 0.0
        %1935 = vmatmul.mubr.f32.gmra.mrb[0].mxu0 %v1843
        %v1936 = vpop.f32.mrb[0].mxu0
        %v1937 = vadd.f32 0.0, %v1936
        %v1938 = vpop.f32.mrb[0].mxu0
        %1939 = vdwg.mxu0
        %v1940 = vld [vmem:[%s12] sm:$0x1]
        %v1942 = vlaneseq
        %v1943 = vshrl.u32 %v1942, 7
        %v1944 = vsub.s32 0, %v1943
        %v1945 = vrot.slane %v1940, %v1944
        %v1947 = vadd.f32 %v1945, %v1912
        %1949 = vrot.lane.b32.xlu0 %v1917, 120
        %v1950 = vpop.permute.xlu0 %1949
        %v1952 = vadd.f32 %v1947, %v1950
        %1954 = vrot.lane.b32.xlu0 %v1922, 112
        %v1955 = vpop.permute.xlu0 %1954
        %v1957 = vadd.f32 %v1952, %v1955
        %1959 = vrot.lane.b32.xlu0 %v1927, 104
        %v1960 = vpop.permute.xlu0 %1959
        %v1962 = vadd.f32 %v1957, %v1960
        %1964 = vrot.lane.b32.xlu0 %v1932, 96
        %v1965 = vpop.permute.xlu0 %1964
        %v1967 = vadd.f32 %v1962, %v1965
        %1969 = vrot.lane.b32.xlu0 %v1937, 88
        %v1970 = vpop.permute.xlu0 %1969
        %v1972 = vadd.f32 %v1967, %v1970
        %1973 = vst.msk [vmem:[%s548] sm:$0xff] %vm1826, %v1972
        %p1974 = scmp.lt.s32.totalorder %s24, 1
        %s1975 = scalar_select %p1974, %s24, 1
        %s1976 = smul.addr %s1975, 8
        %s1977 = scalar_lea.vmem %s13, %s1976
        // Predicated region
        $region111: #{tpu_custom_call.1} parent=105 // pred_check
          %p1978 = pneg %p320
        $region112: #{tpu_custom_call.1} parent=105 // pred_check_branch
          %1980 = sbr.rel (%p1978) target = $region114
        $region113: #{tpu_custom_call.1} parent=105 // pred_region
          _
        $region114: #{tpu_custom_call.1} parent=105 // pred_fallthru
          _
      $region106: #{tpu_custom_call.1} parent=5 // pred_fallthru
        _
      %p1981 = scmp.le.s32.totalorder 2, %s19
      // Predicated region
      $region115: #{tpu_custom_call.1} parent=5 // pred_check
        %p1982 = pneg %p1981
      $region116: #{tpu_custom_call.1} parent=5 // pred_check_branch
        %1984 = sbr.rel (%p1982) target = $region118
      $region117: #{tpu_custom_call.1} parent=5 // pred_region
        %s1985 = ssub.s32 %s19, 2
        // Predicated region
        $region119: #{tpu_custom_call.1} parent=117 // pred_check
          %p1986 = pneg %p326
        $region120: #{tpu_custom_call.1} parent=117 // pred_check_branch
          %1988 = sbr.rel (%p1986) target = $region122
        $region121: #{tpu_custom_call.1} parent=117 // pred_region
          %p1989 = scmp.lt.s32.totalorder %s25, 1
          %s1990 = scalar_select %p1989, %s25, 1
          %s1991 = smul.addr %s1990, 8
          %s1992 = scalar_lea.vmem %s13, %s1991
        $region122: #{tpu_custom_call.1} parent=117 // pred_fallthru
          _
      $region118: #{tpu_custom_call.1} parent=5 // pred_fallthru
        _
    $region6: #{tpu_custom_call.1} parent=1 // loop_footer
      %s23 = sadd.s32 1, %s19
    $region7: #{tpu_custom_call.1} parent=1 // loop_footer_branch
      %18 = sbr.rel target = $region3
    $region8: #{tpu_custom_call.1} parent=1 // loop_exit
      _

</llo_original>
